<compile_context>
chip_gen: v7x
topology: tpu7x:2x2x1
jax: 0.10.0
libtpu: 0.0.40
codegen_flags: <defaults>
</compile_context>

<pallas_src>
import functools

import jax
import jax.numpy as jnp
from jax import lax
from jax.experimental import pallas as pl
from jax.experimental.pallas import tpu as pltpu


def _round_up(x, m):
    return (x + m - 1) // m * m


# ----------------------------- Pallas kernel -------------------------------
def _gru_recurrence_kernel(gi_ref, whh_ref, o_ref, h_ref, *, tc, hp, unroll):
    # gi_ref : (Tc, Bt, 3*Hp) bf16  precomputed input gates, lanes = [r | z | n]
    # whh_ref: (Hp, 3*Hp)     bf16  fused recurrent weights for this direction
    # o_ref  : (Tc, Bt, Hp)   bf16  hidden states (natural time order)
    # h_ref  : (Bt, Hp)       f32   scratch: hidden state carried across chunks
    c = pl.program_id(2)          # time-chunk index (serial / "arbitrary")
    is_rev = pl.program_id(0)     # 0 = forward direction, 1 = backward

    @pl.when(c == 0)
    def _():
        h_ref[...] = jnp.zeros_like(h_ref)

    w = whh_ref[...]              # resident across the whole chunk loop

    def step(s, h):
        # Forward: t = s. Backward: t = tc-1-s, i.e. the time reversal is
        # folded into the loop index (and the chunk index_map), so outputs are
        # written directly in natural time order.
        t = s + is_rev * (tc - 1 - 2 * s)
        gi = gi_ref[t].astype(jnp.float32)                       # (Bt, 3Hp)
        # One fused (Bt,Hp)x(Hp,3Hp) MXU dot per step; f32 accumulation.
        gh = jnp.dot(h.astype(jnp.bfloat16), w,
                     preferred_element_type=jnp.float32)         # (Bt, 3Hp)
        rz = jax.nn.sigmoid(gi[:, :2 * hp] + gh[:, :2 * hp])
        r = rz[:, :hp]
        z = rz[:, hp:]
        n = jnp.tanh(gi[:, 2 * hp:] + r * gh[:, 2 * hp:])
        h_new = n + z * (h - n)                 # == (1-z)*n + z*h
        o_ref[t] = h_new.astype(o_ref.dtype)
        return h_new

    def unrolled_body(cs, h):
        base = cs * unroll
        for u in range(unroll):                 # partial unroll (LLO overlap)
            h = step(base + u, h)
        return h

    h_ref[...] = lax.fori_loop(0, tc // unroll, unrolled_body, h_ref[...])


def _gru_chunked_recurrence(gi, whh, *, tc, bt, unroll, vmem_limit):
    """gi: (D, Tp, Bp, 3Hp) bf16; whh: (D, Hp, 3Hp) bf16 -> (D, Tp, Bp, Hp) bf16."""
    num_dir, tp, bp, hp3 = gi.shape
    hp = hp3 // 3
    nc = tp // tc
    nb = bp // bt

    def gate_map(d, b, c):
        # forward (d==0): chunks in natural order; backward (d==1): reversed.
        return (d, c + d * (nc - 1 - 2 * c), b, 0)

    flops = 2 * num_dir * tp * bp * 3 * hp * hp
    transcendentals = 3 * num_dir * tp * bp * hp
    bytes_accessed = (gi.size * gi.dtype.itemsize
                      + whh.size * whh.dtype.itemsize
                      + num_dir * tp * bp * hp * 2)

    kernel = functools.partial(_gru_recurrence_kernel, tc=tc, hp=hp,
                               unroll=unroll)
    return pl.pallas_call(
        kernel,
        out_shape=jax.ShapeDtypeStruct((num_dir, tp, bp, hp), jnp.bfloat16),
        grid_spec=pltpu.PrefetchScalarGridSpec(
            num_scalar_prefetch=0,
            grid=(num_dir, nb, nc),
            in_specs=[
                pl.BlockSpec((None, tc, bt, 3 * hp), gate_map),
                # W_hh stays resident across the whole chunk loop of a direction
                pl.BlockSpec((None, hp, 3 * hp), lambda d, b, c: (d, 0, 0)),
            ],
            out_specs=pl.BlockSpec((None, tc, bt, hp), gate_map),
            scratch_shapes=[pltpu.VMEM((bt, hp), jnp.float32)],
        ),
        compiler_params=pltpu.CompilerParams(
            # direction & batch tiles are independent (sharded across TCs);
            # the time-chunk axis is a serial recurrence.
            dimension_semantics=("parallel", "parallel", "arbitrary"),
            vmem_limit_bytes=vmem_limit,
        ),
        cost_estimate=pl.CostEstimate(flops=flops,
                                      transcendentals=transcendentals,
                                      bytes_accessed=bytes_accessed),
    )(gi, whh)


def _pick_time_chunk(t_len, bt, hp, requested, unroll):
    """Largest time chunk (multiple of `unroll`) fitting the VMEM budget."""
    tc = max(unroll, min(_round_up(requested, unroll),
                         _round_up(t_len, unroll)))
    budget = 20 * 1024 * 1024      # pipelined-buffer budget, safe on v7x 64MiB

    def vmem_need(c):
        gi = c * bt * 3 * hp * 2        # bf16 gate slab
        out = c * bt * hp * 2           # bf16 output slab
        whh = hp * 3 * hp * 2           # recurrent weights
        scratch = bt * hp * 4           # f32 carry
        return 2 * (gi + out) + 2 * whh + scratch   # double-buffered streams

    while tc > unroll and vmem_need(tc) > budget:
        tc -= unroll
    return tc, vmem_need(tc)


# ------------------------------ layer / module glue ------------------------
def gru_layer(x_tbi, wih, whh, *, time_chunk=128, batch_block=64, unroll=8):
    """One (bi)directional GRU layer, bias=False.

    x_tbi: (T, B, I) time-major. wih: (D, 3, I, H), whh: (D, 3, H, H), gate
    order (r, z, n). Returns (T, B, D*H) time-major (bf16).
    """
    t_len, b, i_sz = x_tbi.shape
    num_dir, _, _, h = wih.shape
    hp = _round_up(h, 128)            # lane-dense H

    # Fused, lane-padded weight layouts: (D, I, 3Hp) and (D, Hp, 3Hp).
    wih_p = jnp.pad(wih, ((0, 0), (0, 0), (0, 0), (0, hp - h)))
    wih_f = jnp.transpose(wih_p, (0, 2, 1, 3)).reshape(num_dir, i_sz, 3 * hp)
    whh_p = jnp.pad(whh, ((0, 0), (0, 0), (0, hp - h), (0, hp - h)))
    whh_f = jnp.transpose(whh_p, (0, 2, 1, 3)).reshape(num_dir, hp, 3 * hp)
    whh_f = whh_f.astype(jnp.bfloat16)

    # Batch tiling / padding (bf16 sublane tile = 16 rows).
    bt = min(batch_block, _round_up(b, 16))
    bp = _round_up(b, bt)
    tc, need = _pick_time_chunk(t_len, bt, hp, time_chunk, unroll)
    tp = _round_up(t_len, tc)

    # Zero padding is exact: with bias=False, zero input gates and h == 0 a GRU
    # step keeps h == 0, so padded time (processed first by the reversed
    # direction), padded batch rows and padded H lanes never perturb valid
    # outputs.
    xp = jnp.pad(x_tbi, ((0, tp - t_len), (0, bp - b), (0, 0)))

    # Hoisted input projection: one large bf16 MXU matmul covering all
    # timesteps, gates and directions -> (D, Tp, Bp, 3Hp) bf16.
    gi = jnp.einsum('tbi,dik->dtbk', xp.astype(jnp.bfloat16),
                    wih_f.astype(jnp.bfloat16),
                    preferred_element_type=jnp.float32).astype(jnp.bfloat16)

    vmem_limit = int(max(32 * 1024 * 1024, min(48 * 1024 * 1024, 2 * need)))
    y = _gru_chunked_recurrence(gi, whh_f, tc=tc, bt=bt, unroll=unroll,
                                vmem_limit=vmem_limit)     # (D, Tp, Bp, Hp)
    y = y[:, :t_len, :b, :h]                               # (D, T, B, H)
    # -> (T, B, D*H); feature concat order [fwd, bwd] matches torch.nn.GRU.
    return jnp.transpose(y, (1, 2, 0, 3)).reshape(t_len, b, num_dir * h)


def seq_to_seq_forward(x_bti, params, *, time_chunk=128, batch_block=64,
                       unroll=8):
    """SeqToSeq forward: x (B, T, I) -> (B, T, H * num_directions)."""
    h = jnp.transpose(x_bti, (1, 0, 2))   # time-major once
    for wih, whh in params:
        h = gru_layer(h, wih, whh, time_chunk=time_chunk,
                      batch_block=batch_block, unroll=unroll)
    return jnp.transpose(h, (1, 0, 2)).astype(x_bti.dtype)


def init_seq_to_seq_params(key, input_size, hidden_size, num_layers,
                           bidirectional=True):
    """U(-1/sqrt(H), 1/sqrt(H)) init matching torch.nn.GRU defaults.

    Per layer: wih (D, 3, in_size, H), whh (D, 3, H, H), gate order (r, z, n),
    stored so that x @ wih[d, g] == x @ W_i{g}^T (bias=False).
    """
    num_dir = 2 if bidirectional else 1
    std = 1.0 / float(hidden_size) ** 0.5
    params = []
    for layer in range(num_layers):
        in_size = input_size if layer == 0 else hidden_size * num_dir
        key, k1, k2 = jax.random.split(key, 3)
        wih = jax.random.uniform(k1, (num_dir, 3, in_size, hidden_size),
                                 jnp.float32, -std, std)
        whh = jax.random.uniform(k2, (num_dir, 3, hidden_size, hidden_size),
                                 jnp.float32, -std, std)
        params.append((wih, whh))
    return params


# --------------------------- pure-JAX reference -----------------------------
def _gru_layer_ref(x_tbi, wih_d, whh_d):
    """Single direction reference. wih_d: (3, I, H), whh_d: (3, H, H)."""
    hdim = whh_d.shape[-1]
    b = x_tbi.shape[1]

    def step(hm, x_t):
        gi = jnp.einsum('bi,gih->gbh', x_t, wih_d)
        gh = jnp.einsum('bh,ghk->gbk', hm, whh_d)
        r = jax.nn.sigmoid(gi[0] + gh[0])
        z = jax.nn.sigmoid(gi[1] + gh[1])
        n = jnp.tanh(gi[2] + r * gh[2])
        h_new = (1.0 - z) * n + z * hm
        return h_new, h_new

    h0 = jnp.zeros((b, hdim), jnp.float32)
    _, ys = lax.scan(step, h0, x_tbi)
    return ys


def seq_to_seq_ref(x_bti, params):
    h = jnp.transpose(x_bti, (1, 0, 2))
    for wih, whh in params:
        num_dir = wih.shape[0]
        outs = []
        for d in range(num_dir):
            xs = h[::-1] if d == 1 else h
            y = _gru_layer_ref(xs, wih[d], whh[d])
            if d == 1:
                y = y[::-1]
            outs.append(y)
        h = jnp.concatenate(outs, axis=-1) if num_dir == 2 else outs[0]
    return jnp.transpose(h, (1, 0, 2))


# --------------------------------- main -------------------------------------
if __name__ == "__main__":
    B, T, INPUT_SIZE, HIDDEN, LAYERS = 2, 8, 4, 32, 2
    BIDIR = True

    key = jax.random.PRNGKey(0)
    key, kx = jax.random.split(key)
    x = jax.random.normal(kx, (B, T, INPUT_SIZE), jnp.float32)

    params = init_seq_to_seq_params(key, INPUT_SIZE, HIDDEN, LAYERS, BIDIR)

    fwd = jax.jit(seq_to_seq_forward)
    out = jax.block_until_ready(fwd(x, params))

    expected_shape = (B, T, HIDDEN * (2 if BIDIR else 1))
    assert out.shape == expected_shape, (out.shape, expected_shape)

    ref = jax.block_until_ready(seq_to_seq_ref(x, params))
    max_err = float(jnp.max(jnp.abs(out.astype(jnp.float32) - ref)))
    # bf16-streamed kernel vs f32 reference: loose tolerance; still catches
    # structural bugs (gate order / direction / padding), which are O(1).
    assert max_err < 1e-1, max_err

    print("KERNEL_OK")
</pallas_src>

<mosaic_0001>
module attributes {stable_mosaic.version = 11 : i64} {
  func.func @_gru_recurrence_kernel(%arg0: i32, %arg1: i32, %arg2: i32, %arg3: memref<1x8x16x384xbf16, #tpu.memory_space<vmem>>, %arg4: memref<1x128x384xbf16, #tpu.memory_space<vmem>>, %arg5: memref<1x8x16x128xbf16, #tpu.memory_space<vmem>>, %arg6: memref<16x128xf32, #tpu.memory_space<vmem>>) attributes {dimension_semantics = [#tpu.dimension_semantics<parallel>, #tpu.dimension_semantics<parallel>, #tpu.dimension_semantics<arbitrary>], iteration_bounds = array<i64: 2, 1, 1>, scalar_prefetch = 0 : i64, scratch_operands = 1 : i64, tpu.core_type = #tpu.core_type<tc>, window_params = [{transform_indices = @transform_0, window_bounds = array<i64: 1, 8, 16, 384>}, {transform_indices = @transform_1, window_bounds = array<i64: 1, 128, 384>}, {transform_indices = @transform_2, window_bounds = array<i64: 1, 8, 16, 128>}]} {
    %c0_i32 = arith.constant 0 : i32
    %0 = arith.cmpi eq, %arg2, %c0_i32 : i32
    %1 = arith.extui %0 : i1 to i32
    %c0_i32_0 = arith.constant 0 : i32
    %2 = arith.cmpi ne, %1, %c0_i32_0 : i32
    scf.if %2 {
      %cst_89 = arith.constant 0.000000e+00 : f32
      %280 = vector.broadcast %cst_89 : f32 to vector<16x128xf32>
      %c0_90 = arith.constant 0 : index
      %c0_91 = arith.constant 0 : index
      %281 = vector.load %arg6[%c0_90, %c0_91] : memref<16x128xf32, #tpu.memory_space<vmem>>, vector<16x128xf32>
      tpu.vector_store %arg6[%c0_90, %c0_91], %280 {strides = array<i32>} : memref<16x128xf32, #tpu.memory_space<vmem>>, vector<16x128xf32>,
    } else {
    }
    %c0 = arith.constant 0 : index
    %c0_1 = arith.constant 0 : index
    %c0_2 = arith.constant 0 : index
    %3 = vector.load %arg4[%c0, %c0_1, %c0_2] : memref<1x128x384xbf16, #tpu.memory_space<vmem>>, vector<1x128x384xbf16>
    %4 = vector.shape_cast %3 : vector<1x128x384xbf16> to vector<128x384xbf16>
    %c0_3 = arith.constant 0 : index
    %c0_4 = arith.constant 0 : index
    %5 = vector.load %arg6[%c0_3, %c0_4] : memref<16x128xf32, #tpu.memory_space<vmem>>, vector<16x128xf32>
    %c0_i32_5 = arith.constant 0 : i32
    %c8_i32 = arith.constant 8 : i32
    %6 = arith.muli %c0_i32_5, %c8_i32 : i32
    %c0_i32_6 = arith.constant 0 : i32
    %7 = arith.addi %6, %c0_i32_6 : i32
    %c2_i32 = arith.constant 2 : i32
    %8 = arith.muli %c2_i32, %7 : i32
    %c7_i32 = arith.constant 7 : i32
    %9 = arith.subi %c7_i32, %8 : i32
    %10 = arith.muli %arg0, %9 : i32
    %11 = arith.addi %7, %10 : i32
    %c0_7 = arith.constant 0 : index
    %12 = arith.index_cast %11 : i32 to index
    %c0_8 = arith.constant 0 : index
    %c0_9 = arith.constant 0 : index
    %13 = vector.load %arg3[%c0_7, %12, %c0_8, %c0_9] : memref<1x8x16x384xbf16, #tpu.memory_space<vmem>>, vector<1x1x16x384xbf16>
    %14 = vector.shape_cast %13 : vector<1x1x16x384xbf16> to vector<16x384xbf16>
    %15 = arith.extf %14 : vector<16x384xbf16> to vector<16x384xf32>
    %16 = arith.truncf %5 : vector<16x128xf32> to vector<16x128xbf16>
    %cst = arith.constant dense<0.000000e+00> : vector<16x384xf32>
    %17 = tpu.matmul %16, %4, %cst {dimension_numbers = #tpu.dot_dimension_numbers<[1], [0], [0], [1], [0, 0, 1, 1], [], []>} : vector<16x128xbf16>, vector<128x384xbf16>, vector<16x384xf32> -> vector<16x384xf32>
    %18 = vector.extract_strided_slice %15 {offsets = [0, 0], sizes = [16, 256], strides = [1, 1]} : vector<16x384xf32> to vector<16x256xf32>
    %19 = vector.extract_strided_slice %17 {offsets = [0, 0], sizes = [16, 256], strides = [1, 1]} : vector<16x384xf32> to vector<16x256xf32>
    %20 = arith.addf %18, %19 : vector<16x256xf32>
    %21 = arith.negf %20 : vector<16x256xf32>
    %22 = math.exp %21 : vector<16x256xf32>
    %cst_10 = arith.constant 1.000000e+00 : f32
    %23 = vector.broadcast %cst_10 : f32 to vector<16x256xf32>
    %24 = arith.addf %23, %22 : vector<16x256xf32>
    %25 = arith.divf %23, %24 : vector<16x256xf32>
    %26 = vector.extract_strided_slice %25 {offsets = [0, 0], sizes = [16, 128], strides = [1, 1]} : vector<16x256xf32> to vector<16x128xf32>
    %27 = vector.extract_strided_slice %25 {offsets = [0, 128], sizes = [16, 128], strides = [1, 1]} : vector<16x256xf32> to vector<16x128xf32>
    %28 = vector.extract_strided_slice %15 {offsets = [0, 256], sizes = [16, 128], strides = [1, 1]} : vector<16x384xf32> to vector<16x128xf32>
    %29 = vector.extract_strided_slice %17 {offsets = [0, 256], sizes = [16, 128], strides = [1, 1]} : vector<16x384xf32> to vector<16x128xf32>
    %30 = arith.mulf %26, %29 : vector<16x128xf32>
    %31 = arith.addf %28, %30 : vector<16x128xf32>
    %32 = math.tanh %31 : vector<16x128xf32>
    %33 = arith.subf %5, %32 : vector<16x128xf32>
    %34 = arith.mulf %27, %33 : vector<16x128xf32>
    %35 = arith.addf %32, %34 : vector<16x128xf32>
    %36 = arith.truncf %35 : vector<16x128xf32> to vector<16x128xbf16>
    %c0_11 = arith.constant 0 : index
    %37 = arith.index_cast %11 : i32 to index
    %c0_12 = arith.constant 0 : index
    %c0_13 = arith.constant 0 : index
    %38 = vector.load %arg5[%c0_11, %37, %c0_12, %c0_13] : memref<1x8x16x128xbf16, #tpu.memory_space<vmem>>, vector<1x1x16x128xbf16>
    %39 = vector.shape_cast %38 : vector<1x1x16x128xbf16> to vector<16x128xbf16>
    %40 = vector.shape_cast %36 : vector<16x128xbf16> to vector<1x1x16x128xbf16>
    tpu.vector_store %arg5[%c0_11, %37, %c0_12, %c0_13], %40 {strides = array<i32>} : memref<1x8x16x128xbf16, #tpu.memory_space<vmem>>, vector<1x1x16x128xbf16>,
    %c1_i32 = arith.constant 1 : i32
    %41 = arith.addi %6, %c1_i32 : i32
    %c2_i32_14 = arith.constant 2 : i32
    %42 = arith.muli %c2_i32_14, %41 : i32
    %c7_i32_15 = arith.constant 7 : i32
    %43 = arith.subi %c7_i32_15, %42 : i32
    %44 = arith.muli %arg0, %43 : i32
    %45 = arith.addi %41, %44 : i32
    %c0_16 = arith.constant 0 : index
    %46 = arith.index_cast %45 : i32 to index
    %c0_17 = arith.constant 0 : index
    %c0_18 = arith.constant 0 : index
    %47 = vector.load %arg3[%c0_16, %46, %c0_17, %c0_18] : memref<1x8x16x384xbf16, #tpu.memory_space<vmem>>, vector<1x1x16x384xbf16>
    %48 = vector.shape_cast %47 : vector<1x1x16x384xbf16> to vector<16x384xbf16>
    %49 = arith.extf %48 : vector<16x384xbf16> to vector<16x384xf32>
    %50 = arith.truncf %35 : vector<16x128xf32> to vector<16x128xbf16>
    %cst_19 = arith.constant dense<0.000000e+00> : vector<16x384xf32>
    %51 = tpu.matmul %50, %4, %cst_19 {dimension_numbers = #tpu.dot_dimension_numbers<[1], [0], [0], [1], [0, 0, 1, 1], [], []>} : vector<16x128xbf16>, vector<128x384xbf16>, vector<16x384xf32> -> vector<16x384xf32>
    %52 = vector.extract_strided_slice %49 {offsets = [0, 0], sizes = [16, 256], strides = [1, 1]} : vector<16x384xf32> to vector<16x256xf32>
    %53 = vector.extract_strided_slice %51 {offsets = [0, 0], sizes = [16, 256], strides = [1, 1]} : vector<16x384xf32> to vector<16x256xf32>
    %54 = arith.addf %52, %53 : vector<16x256xf32>
    %55 = arith.negf %54 : vector<16x256xf32>
    %56 = math.exp %55 : vector<16x256xf32>
    %cst_20 = arith.constant 1.000000e+00 : f32
    %57 = vector.broadcast %cst_20 : f32 to vector<16x256xf32>
    %58 = arith.addf %57, %56 : vector<16x256xf32>
    %59 = arith.divf %57, %58 : vector<16x256xf32>
    %60 = vector.extract_strided_slice %59 {offsets = [0, 0], sizes = [16, 128], strides = [1, 1]} : vector<16x256xf32> to vector<16x128xf32>
    %61 = vector.extract_strided_slice %59 {offsets = [0, 128], sizes = [16, 128], strides = [1, 1]} : vector<16x256xf32> to vector<16x128xf32>
    %62 = vector.extract_strided_slice %49 {offsets = [0, 256], sizes = [16, 128], strides = [1, 1]} : vector<16x384xf32> to vector<16x128xf32>
    %63 = vector.extract_strided_slice %51 {offsets = [0, 256], sizes = [16, 128], strides = [1, 1]} : vector<16x384xf32> to vector<16x128xf32>
    %64 = arith.mulf %60, %63 : vector<16x128xf32>
    %65 = arith.addf %62, %64 : vector<16x128xf32>
    %66 = math.tanh %65 : vector<16x128xf32>
    %67 = arith.subf %35, %66 : vector<16x128xf32>
    %68 = arith.mulf %61, %67 : vector<16x128xf32>
    %69 = arith.addf %66, %68 : vector<16x128xf32>
    %70 = arith.truncf %69 : vector<16x128xf32> to vector<16x128xbf16>
    %c0_21 = arith.constant 0 : index
    %71 = arith.index_cast %45 : i32 to index
    %c0_22 = arith.constant 0 : index
    %c0_23 = arith.constant 0 : index
    %72 = vector.load %arg5[%c0_21, %71, %c0_22, %c0_23] : memref<1x8x16x128xbf16, #tpu.memory_space<vmem>>, vector<1x1x16x128xbf16>
    %73 = vector.shape_cast %72 : vector<1x1x16x128xbf16> to vector<16x128xbf16>
    %74 = vector.shape_cast %70 : vector<16x128xbf16> to vector<1x1x16x128xbf16>
    tpu.vector_store %arg5[%c0_21, %71, %c0_22, %c0_23], %74 {strides = array<i32>} : memref<1x8x16x128xbf16, #tpu.memory_space<vmem>>, vector<1x1x16x128xbf16>,
    %c2_i32_24 = arith.constant 2 : i32
    %75 = arith.addi %6, %c2_i32_24 : i32
    %c2_i32_25 = arith.constant 2 : i32
    %76 = arith.muli %c2_i32_25, %75 : i32
    %c7_i32_26 = arith.constant 7 : i32
    %77 = arith.subi %c7_i32_26, %76 : i32
    %78 = arith.muli %arg0, %77 : i32
    %79 = arith.addi %75, %78 : i32
    %c0_27 = arith.constant 0 : index
    %80 = arith.index_cast %79 : i32 to index
    %c0_28 = arith.constant 0 : index
    %c0_29 = arith.constant 0 : index
    %81 = vector.load %arg3[%c0_27, %80, %c0_28, %c0_29] : memref<1x8x16x384xbf16, #tpu.memory_space<vmem>>, vector<1x1x16x384xbf16>
    %82 = vector.shape_cast %81 : vector<1x1x16x384xbf16> to vector<16x384xbf16>
    %83 = arith.extf %82 : vector<16x384xbf16> to vector<16x384xf32>
    %84 = arith.truncf %69 : vector<16x128xf32> to vector<16x128xbf16>
    %cst_30 = arith.constant dense<0.000000e+00> : vector<16x384xf32>
    %85 = tpu.matmul %84, %4, %cst_30 {dimension_numbers = #tpu.dot_dimension_numbers<[1], [0], [0], [1], [0, 0, 1, 1], [], []>} : vector<16x128xbf16>, vector<128x384xbf16>, vector<16x384xf32> -> vector<16x384xf32>
    %86 = vector.extract_strided_slice %83 {offsets = [0, 0], sizes = [16, 256], strides = [1, 1]} : vector<16x384xf32> to vector<16x256xf32>
    %87 = vector.extract_strided_slice %85 {offsets = [0, 0], sizes = [16, 256], strides = [1, 1]} : vector<16x384xf32> to vector<16x256xf32>
    %88 = arith.addf %86, %87 : vector<16x256xf32>
    %89 = arith.negf %88 : vector<16x256xf32>
    %90 = math.exp %89 : vector<16x256xf32>
    %cst_31 = arith.constant 1.000000e+00 : f32
    %91 = vector.broadcast %cst_31 : f32 to vector<16x256xf32>
    %92 = arith.addf %91, %90 : vector<16x256xf32>
    %93 = arith.divf %91, %92 : vector<16x256xf32>
    %94 = vector.extract_strided_slice %93 {offsets = [0, 0], sizes = [16, 128], strides = [1, 1]} : vector<16x256xf32> to vector<16x128xf32>
    %95 = vector.extract_strided_slice %93 {offsets = [0, 128], sizes = [16, 128], strides = [1, 1]} : vector<16x256xf32> to vector<16x128xf32>
    %96 = vector.extract_strided_slice %83 {offsets = [0, 256], sizes = [16, 128], strides = [1, 1]} : vector<16x384xf32> to vector<16x128xf32>
    %97 = vector.extract_strided_slice %85 {offsets = [0, 256], sizes = [16, 128], strides = [1, 1]} : vector<16x384xf32> to vector<16x128xf32>
    %98 = arith.mulf %94, %97 : vector<16x128xf32>
    %99 = arith.addf %96, %98 : vector<16x128xf32>
    %100 = math.tanh %99 : vector<16x128xf32>
    %101 = arith.subf %69, %100 : vector<16x128xf32>
    %102 = arith.mulf %95, %101 : vector<16x128xf32>
    %103 = arith.addf %100, %102 : vector<16x128xf32>
    %104 = arith.truncf %103 : vector<16x128xf32> to vector<16x128xbf16>
    %c0_32 = arith.constant 0 : index
    %105 = arith.index_cast %79 : i32 to index
    %c0_33 = arith.constant 0 : index
    %c0_34 = arith.constant 0 : index
    %106 = vector.load %arg5[%c0_32, %105, %c0_33, %c0_34] : memref<1x8x16x128xbf16, #tpu.memory_space<vmem>>, vector<1x1x16x128xbf16>
    %107 = vector.shape_cast %106 : vector<1x1x16x128xbf16> to vector<16x128xbf16>
    %108 = vector.shape_cast %104 : vector<16x128xbf16> to vector<1x1x16x128xbf16>
    tpu.vector_store %arg5[%c0_32, %105, %c0_33, %c0_34], %108 {strides = array<i32>} : memref<1x8x16x128xbf16, #tpu.memory_space<vmem>>, vector<1x1x16x128xbf16>,
    %c3_i32 = arith.constant 3 : i32
    %109 = arith.addi %6, %c3_i32 : i32
    %c2_i32_35 = arith.constant 2 : i32
    %110 = arith.muli %c2_i32_35, %109 : i32
    %c7_i32_36 = arith.constant 7 : i32
    %111 = arith.subi %c7_i32_36, %110 : i32
    %112 = arith.muli %arg0, %111 : i32
    %113 = arith.addi %109, %112 : i32
    %c0_37 = arith.constant 0 : index
    %114 = arith.index_cast %113 : i32 to index
    %c0_38 = arith.constant 0 : index
    %c0_39 = arith.constant 0 : index
    %115 = vector.load %arg3[%c0_37, %114, %c0_38, %c0_39] : memref<1x8x16x384xbf16, #tpu.memory_space<vmem>>, vector<1x1x16x384xbf16>
    %116 = vector.shape_cast %115 : vector<1x1x16x384xbf16> to vector<16x384xbf16>
    %117 = arith.extf %116 : vector<16x384xbf16> to vector<16x384xf32>
    %118 = arith.truncf %103 : vector<16x128xf32> to vector<16x128xbf16>
    %cst_40 = arith.constant dense<0.000000e+00> : vector<16x384xf32>
    %119 = tpu.matmul %118, %4, %cst_40 {dimension_numbers = #tpu.dot_dimension_numbers<[1], [0], [0], [1], [0, 0, 1, 1], [], []>} : vector<16x128xbf16>, vector<128x384xbf16>, vector<16x384xf32> -> vector<16x384xf32>
    %120 = vector.extract_strided_slice %117 {offsets = [0, 0], sizes = [16, 256], strides = [1, 1]} : vector<16x384xf32> to vector<16x256xf32>
    %121 = vector.extract_strided_slice %119 {offsets = [0, 0], sizes = [16, 256], strides = [1, 1]} : vector<16x384xf32> to vector<16x256xf32>
    %122 = arith.addf %120, %121 : vector<16x256xf32>
    %123 = arith.negf %122 : vector<16x256xf32>
    %124 = math.exp %123 : vector<16x256xf32>
    %cst_41 = arith.constant 1.000000e+00 : f32
    %125 = vector.broadcast %cst_41 : f32 to vector<16x256xf32>
    %126 = arith.addf %125, %124 : vector<16x256xf32>
    %127 = arith.divf %125, %126 : vector<16x256xf32>
    %128 = vector.extract_strided_slice %127 {offsets = [0, 0], sizes = [16, 128], strides = [1, 1]} : vector<16x256xf32> to vector<16x128xf32>
    %129 = vector.extract_strided_slice %127 {offsets = [0, 128], sizes = [16, 128], strides = [1, 1]} : vector<16x256xf32> to vector<16x128xf32>
    %130 = vector.extract_strided_slice %117 {offsets = [0, 256], sizes = [16, 128], strides = [1, 1]} : vector<16x384xf32> to vector<16x128xf32>
    %131 = vector.extract_strided_slice %119 {offsets = [0, 256], sizes = [16, 128], strides = [1, 1]} : vector<16x384xf32> to vector<16x128xf32>
    %132 = arith.mulf %128, %131 : vector<16x128xf32>
    %133 = arith.addf %130, %132 : vector<16x128xf32>
    %134 = math.tanh %133 : vector<16x128xf32>
    %135 = arith.subf %103, %134 : vector<16x128xf32>
    %136 = arith.mulf %129, %135 : vector<16x128xf32>
    %137 = arith.addf %134, %136 : vector<16x128xf32>
    %138 = arith.truncf %137 : vector<16x128xf32> to vector<16x128xbf16>
    %c0_42 = arith.constant 0 : index
    %139 = arith.index_cast %113 : i32 to index
    %c0_43 = arith.constant 0 : index
    %c0_44 = arith.constant 0 : index
    %140 = vector.load %arg5[%c0_42, %139, %c0_43, %c0_44] : memref<1x8x16x128xbf16, #tpu.memory_space<vmem>>, vector<1x1x16x128xbf16>
    %141 = vector.shape_cast %140 : vector<1x1x16x128xbf16> to vector<16x128xbf16>
    %142 = vector.shape_cast %138 : vector<16x128xbf16> to vector<1x1x16x128xbf16>
    tpu.vector_store %arg5[%c0_42, %139, %c0_43, %c0_44], %142 {strides = array<i32>} : memref<1x8x16x128xbf16, #tpu.memory_space<vmem>>, vector<1x1x16x128xbf16>,
    %c4_i32 = arith.constant 4 : i32
    %143 = arith.addi %6, %c4_i32 : i32
    %c2_i32_45 = arith.constant 2 : i32
    %144 = arith.muli %c2_i32_45, %143 : i32
    %c7_i32_46 = arith.constant 7 : i32
    %145 = arith.subi %c7_i32_46, %144 : i32
    %146 = arith.muli %arg0, %145 : i32
    %147 = arith.addi %143, %146 : i32
    %c0_47 = arith.constant 0 : index
    %148 = arith.index_cast %147 : i32 to index
    %c0_48 = arith.constant 0 : index
    %c0_49 = arith.constant 0 : index
    %149 = vector.load %arg3[%c0_47, %148, %c0_48, %c0_49] : memref<1x8x16x384xbf16, #tpu.memory_space<vmem>>, vector<1x1x16x384xbf16>
    %150 = vector.shape_cast %149 : vector<1x1x16x384xbf16> to vector<16x384xbf16>
    %151 = arith.extf %150 : vector<16x384xbf16> to vector<16x384xf32>
    %152 = arith.truncf %137 : vector<16x128xf32> to vector<16x128xbf16>
    %cst_50 = arith.constant dense<0.000000e+00> : vector<16x384xf32>
    %153 = tpu.matmul %152, %4, %cst_50 {dimension_numbers = #tpu.dot_dimension_numbers<[1], [0], [0], [1], [0, 0, 1, 1], [], []>} : vector<16x128xbf16>, vector<128x384xbf16>, vector<16x384xf32> -> vector<16x384xf32>
    %154 = vector.extract_strided_slice %151 {offsets = [0, 0], sizes = [16, 256], strides = [1, 1]} : vector<16x384xf32> to vector<16x256xf32>
    %155 = vector.extract_strided_slice %153 {offsets = [0, 0], sizes = [16, 256], strides = [1, 1]} : vector<16x384xf32> to vector<16x256xf32>
    %156 = arith.addf %154, %155 : vector<16x256xf32>
    %157 = arith.negf %156 : vector<16x256xf32>
    %158 = math.exp %157 : vector<16x256xf32>
    %cst_51 = arith.constant 1.000000e+00 : f32
    %159 = vector.broadcast %cst_51 : f32 to vector<16x256xf32>
    %160 = arith.addf %159, %158 : vector<16x256xf32>
    %161 = arith.divf %159, %160 : vector<16x256xf32>
    %162 = vector.extract_strided_slice %161 {offsets = [0, 0], sizes = [16, 128], strides = [1, 1]} : vector<16x256xf32> to vector<16x128xf32>
    %163 = vector.extract_strided_slice %161 {offsets = [0, 128], sizes = [16, 128], strides = [1, 1]} : vector<16x256xf32> to vector<16x128xf32>
    %164 = vector.extract_strided_slice %151 {offsets = [0, 256], sizes = [16, 128], strides = [1, 1]} : vector<16x384xf32> to vector<16x128xf32>
    %165 = vector.extract_strided_slice %153 {offsets = [0, 256], sizes = [16, 128], strides = [1, 1]} : vector<16x384xf32> to vector<16x128xf32>
    %166 = arith.mulf %162, %165 : vector<16x128xf32>
    %167 = arith.addf %164, %166 : vector<16x128xf32>
    %168 = math.tanh %167 : vector<16x128xf32>
    %169 = arith.subf %137, %168 : vector<16x128xf32>
    %170 = arith.mulf %163, %169 : vector<16x128xf32>
    %171 = arith.addf %168, %170 : vector<16x128xf32>
    %172 = arith.truncf %171 : vector<16x128xf32> to vector<16x128xbf16>
    %c0_52 = arith.constant 0 : index
    %173 = arith.index_cast %147 : i32 to index
    %c0_53 = arith.constant 0 : index
    %c0_54 = arith.constant 0 : index
    %174 = vector.load %arg5[%c0_52, %173, %c0_53, %c0_54] : memref<1x8x16x128xbf16, #tpu.memory_space<vmem>>, vector<1x1x16x128xbf16>
    %175 = vector.shape_cast %174 : vector<1x1x16x128xbf16> to vector<16x128xbf16>
    %176 = vector.shape_cast %172 : vector<16x128xbf16> to vector<1x1x16x128xbf16>
    tpu.vector_store %arg5[%c0_52, %173, %c0_53, %c0_54], %176 {strides = array<i32>} : memref<1x8x16x128xbf16, #tpu.memory_space<vmem>>, vector<1x1x16x128xbf16>,
    %c5_i32 = arith.constant 5 : i32
    %177 = arith.addi %6, %c5_i32 : i32
    %c2_i32_55 = arith.constant 2 : i32
    %178 = arith.muli %c2_i32_55, %177 : i32
    %c7_i32_56 = arith.constant 7 : i32
    %179 = arith.subi %c7_i32_56, %178 : i32
    %180 = arith.muli %arg0, %179 : i32
    %181 = arith.addi %177, %180 : i32
    %c0_57 = arith.constant 0 : index
    %182 = arith.index_cast %181 : i32 to index
    %c0_58 = arith.constant 0 : index
    %c0_59 = arith.constant 0 : index
    %183 = vector.load %arg3[%c0_57, %182, %c0_58, %c0_59] : memref<1x8x16x384xbf16, #tpu.memory_space<vmem>>, vector<1x1x16x384xbf16>
    %184 = vector.shape_cast %183 : vector<1x1x16x384xbf16> to vector<16x384xbf16>
    %185 = arith.extf %184 : vector<16x384xbf16> to vector<16x384xf32>
    %186 = arith.truncf %171 : vector<16x128xf32> to vector<16x128xbf16>
    %cst_60 = arith.constant dense<0.000000e+00> : vector<16x384xf32>
    %187 = tpu.matmul %186, %4, %cst_60 {dimension_numbers = #tpu.dot_dimension_numbers<[1], [0], [0], [1], [0, 0, 1, 1], [], []>} : vector<16x128xbf16>, vector<128x384xbf16>, vector<16x384xf32> -> vector<16x384xf32>
    %188 = vector.extract_strided_slice %185 {offsets = [0, 0], sizes = [16, 256], strides = [1, 1]} : vector<16x384xf32> to vector<16x256xf32>
    %189 = vector.extract_strided_slice %187 {offsets = [0, 0], sizes = [16, 256], strides = [1, 1]} : vector<16x384xf32> to vector<16x256xf32>
    %190 = arith.addf %188, %189 : vector<16x256xf32>
    %191 = arith.negf %190 : vector<16x256xf32>
    %192 = math.exp %191 : vector<16x256xf32>
    %cst_61 = arith.constant 1.000000e+00 : f32
    %193 = vector.broadcast %cst_61 : f32 to vector<16x256xf32>
    %194 = arith.addf %193, %192 : vector<16x256xf32>
    %195 = arith.divf %193, %194 : vector<16x256xf32>
    %196 = vector.extract_strided_slice %195 {offsets = [0, 0], sizes = [16, 128], strides = [1, 1]} : vector<16x256xf32> to vector<16x128xf32>
    %197 = vector.extract_strided_slice %195 {offsets = [0, 128], sizes = [16, 128], strides = [1, 1]} : vector<16x256xf32> to vector<16x128xf32>
    %198 = vector.extract_strided_slice %185 {offsets = [0, 256], sizes = [16, 128], strides = [1, 1]} : vector<16x384xf32> to vector<16x128xf32>
    %199 = vector.extract_strided_slice %187 {offsets = [0, 256], sizes = [16, 128], strides = [1, 1]} : vector<16x384xf32> to vector<16x128xf32>
    %200 = arith.mulf %196, %199 : vector<16x128xf32>
    %201 = arith.addf %198, %200 : vector<16x128xf32>
    %202 = math.tanh %201 : vector<16x128xf32>
    %203 = arith.subf %171, %202 : vector<16x128xf32>
    %204 = arith.mulf %197, %203 : vector<16x128xf32>
    %205 = arith.addf %202, %204 : vector<16x128xf32>
    %206 = arith.truncf %205 : vector<16x128xf32> to vector<16x128xbf16>
    %c0_62 = arith.constant 0 : index
    %207 = arith.index_cast %181 : i32 to index
    %c0_63 = arith.constant 0 : index
    %c0_64 = arith.constant 0 : index
    %208 = vector.load %arg5[%c0_62, %207, %c0_63, %c0_64] : memref<1x8x16x128xbf16, #tpu.memory_space<vmem>>, vector<1x1x16x128xbf16>
    %209 = vector.shape_cast %208 : vector<1x1x16x128xbf16> to vector<16x128xbf16>
    %210 = vector.shape_cast %206 : vector<16x128xbf16> to vector<1x1x16x128xbf16>
    tpu.vector_store %arg5[%c0_62, %207, %c0_63, %c0_64], %210 {strides = array<i32>} : memref<1x8x16x128xbf16, #tpu.memory_space<vmem>>, vector<1x1x16x128xbf16>,
    %c6_i32 = arith.constant 6 : i32
    %211 = arith.addi %6, %c6_i32 : i32
    %c2_i32_65 = arith.constant 2 : i32
    %212 = arith.muli %c2_i32_65, %211 : i32
    %c7_i32_66 = arith.constant 7 : i32
    %213 = arith.subi %c7_i32_66, %212 : i32
    %214 = arith.muli %arg0, %213 : i32
    %215 = arith.addi %211, %214 : i32
    %c0_67 = arith.constant 0 : index
    %216 = arith.index_cast %215 : i32 to index
    %c0_68 = arith.constant 0 : index
    %c0_69 = arith.constant 0 : index
    %217 = vector.load %arg3[%c0_67, %216, %c0_68, %c0_69] : memref<1x8x16x384xbf16, #tpu.memory_space<vmem>>, vector<1x1x16x384xbf16>
    %218 = vector.shape_cast %217 : vector<1x1x16x384xbf16> to vector<16x384xbf16>
    %219 = arith.extf %218 : vector<16x384xbf16> to vector<16x384xf32>
    %220 = arith.truncf %205 : vector<16x128xf32> to vector<16x128xbf16>
    %cst_70 = arith.constant dense<0.000000e+00> : vector<16x384xf32>
    %221 = tpu.matmul %220, %4, %cst_70 {dimension_numbers = #tpu.dot_dimension_numbers<[1], [0], [0], [1], [0, 0, 1, 1], [], []>} : vector<16x128xbf16>, vector<128x384xbf16>, vector<16x384xf32> -> vector<16x384xf32>
    %222 = vector.extract_strided_slice %219 {offsets = [0, 0], sizes = [16, 256], strides = [1, 1]} : vector<16x384xf32> to vector<16x256xf32>
    %223 = vector.extract_strided_slice %221 {offsets = [0, 0], sizes = [16, 256], strides = [1, 1]} : vector<16x384xf32> to vector<16x256xf32>
    %224 = arith.addf %222, %223 : vector<16x256xf32>
    %225 = arith.negf %224 : vector<16x256xf32>
    %226 = math.exp %225 : vector<16x256xf32>
    %cst_71 = arith.constant 1.000000e+00 : f32
    %227 = vector.broadcast %cst_71 : f32 to vector<16x256xf32>
    %228 = arith.addf %227, %226 : vector<16x256xf32>
    %229 = arith.divf %227, %228 : vector<16x256xf32>
    %230 = vector.extract_strided_slice %229 {offsets = [0, 0], sizes = [16, 128], strides = [1, 1]} : vector<16x256xf32> to vector<16x128xf32>
    %231 = vector.extract_strided_slice %229 {offsets = [0, 128], sizes = [16, 128], strides = [1, 1]} : vector<16x256xf32> to vector<16x128xf32>
    %232 = vector.extract_strided_slice %219 {offsets = [0, 256], sizes = [16, 128], strides = [1, 1]} : vector<16x384xf32> to vector<16x128xf32>
    %233 = vector.extract_strided_slice %221 {offsets = [0, 256], sizes = [16, 128], strides = [1, 1]} : vector<16x384xf32> to vector<16x128xf32>
    %234 = arith.mulf %230, %233 : vector<16x128xf32>
    %235 = arith.addf %232, %234 : vector<16x128xf32>
    %236 = math.tanh %235 : vector<16x128xf32>
    %237 = arith.subf %205, %236 : vector<16x128xf32>
    %238 = arith.mulf %231, %237 : vector<16x128xf32>
    %239 = arith.addf %236, %238 : vector<16x128xf32>
    %240 = arith.truncf %239 : vector<16x128xf32> to vector<16x128xbf16>
    %c0_72 = arith.constant 0 : index
    %241 = arith.index_cast %215 : i32 to index
    %c0_73 = arith.constant 0 : index
    %c0_74 = arith.constant 0 : index
    %242 = vector.load %arg5[%c0_72, %241, %c0_73, %c0_74] : memref<1x8x16x128xbf16, #tpu.memory_space<vmem>>, vector<1x1x16x128xbf16>
    %243 = vector.shape_cast %242 : vector<1x1x16x128xbf16> to vector<16x128xbf16>
    %244 = vector.shape_cast %240 : vector<16x128xbf16> to vector<1x1x16x128xbf16>
    tpu.vector_store %arg5[%c0_72, %241, %c0_73, %c0_74], %244 {strides = array<i32>} : memref<1x8x16x128xbf16, #tpu.memory_space<vmem>>, vector<1x1x16x128xbf16>,
    %c7_i32_75 = arith.constant 7 : i32
    %245 = arith.addi %6, %c7_i32_75 : i32
    %c2_i32_76 = arith.constant 2 : i32
    %246 = arith.muli %c2_i32_76, %245 : i32
    %c7_i32_77 = arith.constant 7 : i32
    %247 = arith.subi %c7_i32_77, %246 : i32
    %248 = arith.muli %arg0, %247 : i32
    %249 = arith.addi %245, %248 : i32
    %c0_78 = arith.constant 0 : index
    %250 = arith.index_cast %249 : i32 to index
    %c0_79 = arith.constant 0 : index
    %c0_80 = arith.constant 0 : index
    %251 = vector.load %arg3[%c0_78, %250, %c0_79, %c0_80] : memref<1x8x16x384xbf16, #tpu.memory_space<vmem>>, vector<1x1x16x384xbf16>
    %252 = vector.shape_cast %251 : vector<1x1x16x384xbf16> to vector<16x384xbf16>
    %253 = arith.extf %252 : vector<16x384xbf16> to vector<16x384xf32>
    %254 = arith.truncf %239 : vector<16x128xf32> to vector<16x128xbf16>
    %cst_81 = arith.constant dense<0.000000e+00> : vector<16x384xf32>
    %255 = tpu.matmul %254, %4, %cst_81 {dimension_numbers = #tpu.dot_dimension_numbers<[1], [0], [0], [1], [0, 0, 1, 1], [], []>} : vector<16x128xbf16>, vector<128x384xbf16>, vector<16x384xf32> -> vector<16x384xf32>
    %256 = vector.extract_strided_slice %253 {offsets = [0, 0], sizes = [16, 256], strides = [1, 1]} : vector<16x384xf32> to vector<16x256xf32>
    %257 = vector.extract_strided_slice %255 {offsets = [0, 0], sizes = [16, 256], strides = [1, 1]} : vector<16x384xf32> to vector<16x256xf32>
    %258 = arith.addf %256, %257 : vector<16x256xf32>
    %259 = arith.negf %258 : vector<16x256xf32>
    %260 = math.exp %259 : vector<16x256xf32>
    %cst_82 = arith.constant 1.000000e+00 : f32
    %261 = vector.broadcast %cst_82 : f32 to vector<16x256xf32>
    %262 = arith.addf %261, %260 : vector<16x256xf32>
    %263 = arith.divf %261, %262 : vector<16x256xf32>
    %264 = vector.extract_strided_slice %263 {offsets = [0, 0], sizes = [16, 128], strides = [1, 1]} : vector<16x256xf32> to vector<16x128xf32>
    %265 = vector.extract_strided_slice %263 {offsets = [0, 128], sizes = [16, 128], strides = [1, 1]} : vector<16x256xf32> to vector<16x128xf32>
    %266 = vector.extract_strided_slice %253 {offsets = [0, 256], sizes = [16, 128], strides = [1, 1]} : vector<16x384xf32> to vector<16x128xf32>
    %267 = vector.extract_strided_slice %255 {offsets = [0, 256], sizes = [16, 128], strides = [1, 1]} : vector<16x384xf32> to vector<16x128xf32>
    %268 = arith.mulf %264, %267 : vector<16x128xf32>
    %269 = arith.addf %266, %268 : vector<16x128xf32>
    %270 = math.tanh %269 : vector<16x128xf32>
    %271 = arith.subf %239, %270 : vector<16x128xf32>
    %272 = arith.mulf %265, %271 : vector<16x128xf32>
    %273 = arith.addf %270, %272 : vector<16x128xf32>
    %274 = arith.truncf %273 : vector<16x128xf32> to vector<16x128xbf16>
    %c0_83 = arith.constant 0 : index
    %275 = arith.index_cast %249 : i32 to index
    %c0_84 = arith.constant 0 : index
    %c0_85 = arith.constant 0 : index
    %276 = vector.load %arg5[%c0_83, %275, %c0_84, %c0_85] : memref<1x8x16x128xbf16, #tpu.memory_space<vmem>>, vector<1x1x16x128xbf16>
    %277 = vector.shape_cast %276 : vector<1x1x16x128xbf16> to vector<16x128xbf16>
    %278 = vector.shape_cast %274 : vector<16x128xbf16> to vector<1x1x16x128xbf16>
    tpu.vector_store %arg5[%c0_83, %275, %c0_84, %c0_85], %278 {strides = array<i32>} : memref<1x8x16x128xbf16, #tpu.memory_space<vmem>>, vector<1x1x16x128xbf16>,
    %c1_i32_86 = arith.constant 1 : i32
    %c0_87 = arith.constant 0 : index
    %c0_88 = arith.constant 0 : index
    %279 = vector.load %arg6[%c0_87, %c0_88] : memref<16x128xf32, #tpu.memory_space<vmem>>, vector<16x128xf32>
    tpu.vector_store %arg6[%c0_87, %c0_88], %273 {strides = array<i32>} : memref<16x128xf32, #tpu.memory_space<vmem>>, vector<16x128xf32>,
    return
  }
  func.func @transform_0(%arg0: i32, %arg1: i32, %arg2: i32) -> (i32, i32, i32, i32) {
    %c2_i32 = arith.constant 2 : i32
    %0 = arith.muli %c2_i32, %arg2 : i32
    %c0_i32 = arith.constant 0 : i32
    %1 = arith.subi %c0_i32, %0 : i32
    %2 = arith.muli %arg0, %1 : i32
    %3 = arith.addi %arg2, %2 : i32
    %c0_i32_0 = arith.constant 0 : i32
    %c0_i32_1 = arith.constant 0 : i32
    return %arg0, %3, %arg1, %c0_i32_0 : i32, i32, i32, i32
  }
  func.func @transform_1(%arg0: i32, %arg1: i32, %arg2: i32) -> (i32, i32, i32) {
    %c0_i32 = arith.constant 0 : i32
    %c0_i32_0 = arith.constant 0 : i32
    %c0_i32_1 = arith.constant 0 : i32
    return %arg0, %c0_i32, %c0_i32_0 : i32, i32, i32
  }
  func.func @transform_2(%arg0: i32, %arg1: i32, %arg2: i32) -> (i32, i32, i32, i32) {
    %c2_i32 = arith.constant 2 : i32
    %0 = arith.muli %c2_i32, %arg2 : i32
    %c0_i32 = arith.constant 0 : i32
    %1 = arith.subi %c0_i32, %0 : i32
    %2 = arith.muli %arg0, %1 : i32
    %3 = arith.addi %arg2, %2 : i32
    %c0_i32_0 = arith.constant 0 : i32
    %c0_i32_1 = arith.constant 0 : i32
    return %arg0, %3, %arg1, %c0_i32_0 : i32, i32, i32, i32
  }
}

</mosaic_0001>

<llo_original>
// kernel: seq_to_seq_forward.2
$region0: #{seq_to_seq_forward.2}
  #allocation0 [shape = 'u32[]', space=smem, size = 0x4, offset = 0x4, fixed_abs, tag = 'smem constant byte address 0x4 - core index']
  #allocation1 [shape = 'u32[144,128]{1,0:T(1,128)}', space=vmem, size = 0x12000, scoped, tag = 'internal scratch']
  #allocation2 [shape = 'f32[16,128]{1,0:T(8,128)}', space=vmem, size = 0x2000, scoped, tag = 'scratch operand']
  %s0 = inlined_call_operand.vmem [shape: bf16[2,8,16,384], index: 0, kind: input, shape index: {}]
  %s1 = inlined_call_operand.vmem [shape: bf16[2,128,384], index: 1, kind: input, shape index: {}]
  %s2 = inlined_call_operand.vmem [shape: bf16[2,8,16,128], index: 2, kind: output, shape index: {}]
  %s3 = sld [smem:[#allocation0]]
  $region45: #{seq_to_seq_forward.2} parent=0
    _
  %s5 = ssub.s32 1, %s3
  %s6 = scalar_select 0, %s5, %s3
  loop: start=0, step=1, limit=4
  $region2: #{seq_to_seq_forward.2} parent=0 // loop_pre_header
    _
  $region3: #{seq_to_seq_forward.2} parent=0 // loop_header
    %s8 = sphi 0, %s12
    %p9 = scmp.ge.s32.totalorder %s8, 4
    %s15 = sphi 0, %s34
    %s16 = sphi 0, %s30
    %s17 = sphi 0, %s26
    %s18 = sphi 0, %s15
    %s19 = sphi 0, %s16
    %s20 = sphi 0, %s17
    %s21 = sphi 0, %s18
    %s22 = sphi 0, %s19
    %s23 = sphi 0, %s20
    %s49 = sphi 0, %s51
    %s52 = sphi 0, %s49
    %s53 = sphi 0, %s52
    %s69 = sphi 0, %s53
    %s75 = sphi 0, %s77
    %s78 = sphi 0, %s75
    %s79 = sphi 0, %s78
    %s95 = sphi 0, %s79
    %s113 = sphi 0, %s115
    %s116 = sphi 0, %s113
    %s117 = sphi 0, %s116
    %s133 = sphi 0, %s117
  $region4: #{seq_to_seq_forward.2} parent=0 // loop_header_branch
    %11 = sbr.rel (%p9) target = $region8
  $region5: #{seq_to_seq_forward.2} parent=0 // loop_body
    %s13 = ssub.s32 %s8, 1
    %s14 = ssub.s32 %s8, 2
    %s24 = sadd.s32 1, %s17
    %p25 = scmp.ge.s32.totalorder %s24, 1
    %s26 = scalar_select %p25, 0, %s24
    %s27 = sadd.s32 1, %s16
    %s28 = scalar_select %p25, %s27, %s16
    %p29 = scmp.ge.s32.totalorder %s28, 1
    %s30 = scalar_select %p29, 0, %s28
    %s31 = sadd.s32 1, %s15
    %s32 = scalar_select %p29, %s31, %s15
    %p33 = scmp.ge.s32.totalorder %s32, 2
    %s34 = scalar_select %p33, 0, %s32
    %s35 = smul.u32 %s17, 2
    %s36 = ssub.s32 0, %s35
    %s37 = smul.u32 %s15, %s36
    %s38 = sadd.s32 %s17, %s37
    %s39 = smul.u32 %s26, 2
    %s40 = ssub.s32 0, %s39
    %s41 = smul.u32 %s34, %s40
    %s42 = sadd.s32 %s26, %s41
    %s43 = ssub.s32 %s15, %s34
    %s44 = ssub.s32 %s38, %s42
    %s45 = sor.u32 %s43, %s44
    %s46 = ssub.s32 %s16, %s30
    %s47 = sor.u32 %s45, %s46
    %p48 = scmp.eq.s32.totalorder %s47, 0
    %s50 = sadd.s32 %s49, 1
    %s51 = scalar_select %p48, %s49, %s50
    %p54 = pneg %p48
    %p55 = scmp.eq.s32.totalorder %s8, 1
    %p56 = por %p54, %p55
    %p57 = scmp.ne.s32.totalorder %s49, %s52
    %p58 = scmp.eq.s32.totalorder %s8, 0
    %p59 = por %p57, %p58
    %p60 = scmp.ne.s32.totalorder %s49, %s52
    %p61 = scmp.eq.s32.totalorder %s13, 1
    %p62 = por %p60, %p61
    %p63 = scmp.ne.s32.totalorder %s52, %s53
    %p64 = scmp.eq.s32.totalorder %s13, 0
    %p65 = por %p63, %p64
    %p66 = scmp.ne.s32.totalorder %s52, %s53
    %p67 = scmp.eq.s32.totalorder %s14, 1
    %p68 = por %p66, %p67
    %p70 = scmp.ne.s32.totalorder %s53, %s69
    %p71 = scmp.eq.s32.totalorder %s14, 0
    %p72 = por %p70, %p71
    %s73 = ssub.s32 %s15, %s34
    %p74 = scmp.eq.s32.totalorder %s73, 0
    %s76 = sadd.s32 %s75, 1
    %s77 = scalar_select %p74, %s75, %s76
    %p80 = pneg %p74
    %p81 = scmp.eq.s32.totalorder %s8, 1
    %p82 = por %p80, %p81
    %p83 = scmp.ne.s32.totalorder %s75, %s78
    %p84 = scmp.eq.s32.totalorder %s8, 0
    %p85 = por %p83, %p84
    %p86 = scmp.ne.s32.totalorder %s75, %s78
    %p87 = scmp.eq.s32.totalorder %s13, 1
    %p88 = por %p86, %p87
    %p89 = scmp.ne.s32.totalorder %s78, %s79
    %p90 = scmp.eq.s32.totalorder %s13, 0
    %p91 = por %p89, %p90
    %p92 = scmp.ne.s32.totalorder %s78, %s79
    %p93 = scmp.eq.s32.totalorder %s14, 1
    %p94 = por %p92, %p93
    %p96 = scmp.ne.s32.totalorder %s79, %s95
    %p97 = scmp.eq.s32.totalorder %s14, 0
    %p98 = por %p96, %p97
    %s99 = smul.u32 %s17, 2
    %s100 = ssub.s32 0, %s99
    %s101 = smul.u32 %s15, %s100
    %s102 = sadd.s32 %s17, %s101
    %s103 = smul.u32 %s26, 2
    %s104 = ssub.s32 0, %s103
    %s105 = smul.u32 %s34, %s104
    %s106 = sadd.s32 %s26, %s105
    %s107 = ssub.s32 %s15, %s34
    %s108 = ssub.s32 %s102, %s106
    %s109 = sor.u32 %s107, %s108
    %s110 = ssub.s32 %s16, %s30
    %s111 = sor.u32 %s109, %s110
    %p112 = scmp.eq.s32.totalorder %s111, 0
    %s114 = sadd.s32 %s113, 1
    %s115 = scalar_select %p112, %s113, %s114
    %p118 = pneg %p112
    %p119 = scmp.eq.s32.totalorder %s8, 1
    %p120 = por %p118, %p119
    %p121 = scmp.ne.s32.totalorder %s113, %s116
    %p122 = scmp.eq.s32.totalorder %s8, 0
    %p123 = por %p121, %p122
    %p124 = scmp.ne.s32.totalorder %s113, %s116
    %p125 = scmp.eq.s32.totalorder %s13, 1
    %p126 = por %p124, %p125
    %p127 = scmp.ne.s32.totalorder %s116, %s117
    %p128 = scmp.eq.s32.totalorder %s13, 0
    %p129 = por %p127, %p128
    %p130 = scmp.ne.s32.totalorder %s116, %s117
    %p131 = scmp.eq.s32.totalorder %s14, 1
    %p132 = por %p130, %p131
    %p134 = scmp.ne.s32.totalorder %s117, %s133
    %p135 = scmp.eq.s32.totalorder %s14, 0
    %p136 = por %p134, %p135
    %p137 = scmp.le.s32.totalorder 1, %s8
    %p138 = scmp.lt.s32.totalorder %s8, 3
    %p139 = pnand %p137, %p138
    %p140 = pneg %p139
    // Predicated region
    $region9: #{seq_to_seq_forward.2} parent=5 // pred_check
      _
    $region10: #{seq_to_seq_forward.2} parent=5 // pred_check_branch
      %142 = sbr.rel (%p139) target = $region12
    $region11: #{seq_to_seq_forward.2} parent=5 // pred_region
      %s143 = ssub.s32 %s8, 1
    $region12: #{seq_to_seq_forward.2} parent=5 // pred_fallthru
      _
    %p144 = scmp.lt.s32.totalorder %s8, 2
    // Predicated region
    $region13: #{seq_to_seq_forward.2} parent=5 // pred_check
      %p145 = pneg %p144
    $region14: #{seq_to_seq_forward.2} parent=5 // pred_check_branch
      %147 = sbr.rel (%p145) target = $region16
    $region15: #{seq_to_seq_forward.2} parent=5 // pred_region
      // Predicated region
      $region17: #{seq_to_seq_forward.2} parent=15 // pred_check
        %p148 = pneg %p59
      $region18: #{seq_to_seq_forward.2} parent=15 // pred_check_branch
        %150 = sbr.rel (%p148) target = $region20
      $region19: #{seq_to_seq_forward.2} parent=15 // pred_region
        %s151 = smul.u32 %s17, 2
        %s152 = ssub.s32 0, %s151
        %s153 = smul.u32 %s15, %s152
        %s154 = sadd.s32 %s17, %s153
        %s155 = smul.u32 8, %s154
        %s156 = smul.u32 2, %s16
        %p157 = scmp.lt.s32.totalorder %s15, 1
        %s158 = scalar_select %p157, %s15, 1
        %p159 = scmp.lt.s32.totalorder %s155, 7
        %s160 = scalar_select %p159, %s155, 7
        %p161 = scmp.lt.s32.totalorder %s156, 1
        %s162 = scalar_select %p161, %s156, 1
        %s163 = smul.addr %s162, 3
        %s164 = smul.addr %s160, 6
        %s165 = sadd.s32 %s163, %s164
        %s166 = smul.addr %s158, 48
        %s167 = sadd.s32 %s165, %s166
        %s168 = smul.addr %s167, 4
        %s169 = scalar_lea.vmem %s0, %s168
        %s170 = smul.u32 %s17, 2
        %s171 = ssub.s32 0, %s170
        %s172 = smul.u32 %s15, %s171
        %s173 = sadd.s32 %s17, %s172
        %s174 = smul.u32 8, %s173
        %s175 = smul.u32 2, %s16
      $region20: #{seq_to_seq_forward.2} parent=15 // pred_fallthru
        _
      // Predicated region
      $region21: #{seq_to_seq_forward.2} parent=15 // pred_check
        %p176 = pneg %p85
      $region22: #{seq_to_seq_forward.2} parent=15 // pred_check_branch
        %178 = sbr.rel (%p176) target = $region24
      $region23: #{seq_to_seq_forward.2} parent=15 // pred_region
        %p179 = scmp.lt.s32.totalorder %s15, 1
        %s180 = scalar_select %p179, %s15, 1
        %s181 = smul.addr %s180, 48
        %s182 = smul.addr %s181, 4
        %s183 = scalar_lea.vmem %s1, %s182
      $region24: #{seq_to_seq_forward.2} parent=15 // pred_fallthru
        _
    $region16: #{seq_to_seq_forward.2} parent=5 // pred_fallthru
      _
    %p184 = scmp.le.s32.totalorder 1, %s8
    %p185 = scmp.lt.s32.totalorder %s8, 3
    %p186 = pnand %p184, %p185
    %p187 = pneg %p186
    // Predicated region
    $region25: #{seq_to_seq_forward.2} parent=5 // pred_check
      _
    $region26: #{seq_to_seq_forward.2} parent=5 // pred_check_branch
      %189 = sbr.rel (%p186) target = $region28
    $region27: #{seq_to_seq_forward.2} parent=5 // pred_region
      %s190 = ssub.s32 %s8, 1
      %s191 = smul.u32 %s20, 2
      %s192 = ssub.s32 0, %s191
      %s193 = smul.u32 %s18, %s192
      %s194 = sadd.s32 %s20, %s193
      %s195 = smul.u32 8, %s194
      %s196 = smul.u32 2, %s19
      %p197 = scmp.lt.s32.totalorder %s18, 1
      %s198 = scalar_select %p197, %s18, 1
      %p199 = scmp.lt.s32.totalorder %s195, 7
      %s200 = scalar_select %p199, %s195, 7
      %p201 = scmp.lt.s32.totalorder %s196, 1
      %s202 = scalar_select %p201, %s196, 1
      %s203 = smul.addr %s202, 3
      %s204 = smul.addr %s200, 6
      %s205 = sadd.s32 %s203, %s204
      %s206 = smul.addr %s198, 48
      %s207 = sadd.s32 %s205, %s206
      %s208 = smul.addr %s207, 4
      %s209 = scalar_lea.vmem %s0, %s208
      %p210 = pneg %p65
      %p211 = pneg %p62
      %p212 = scmp.lt.s32.totalorder %s18, 1
      %s213 = scalar_select %p212, %s18, 1
      %s214 = smul.addr %s213, 48
      %s215 = smul.addr %s214, 4
      %s216 = scalar_lea.vmem %s1, %s215
      %p217 = pneg %p91
      %p218 = pneg %p88
      %p219 = pneg %p129
      %p220 = pneg %p126
      %s221 = smul.u32 %s20, 2
      %s222 = ssub.s32 0, %s221
      %s223 = smul.u32 %s18, %s222
      %s224 = sadd.s32 %s20, %s223
      %s225 = smul.u32 8, %s224
      %s226 = smul.u32 2, %s19
      %p227 = scmp.lt.s32.totalorder %s18, 1
      %s228 = scalar_select %p227, %s18, 1
      %p229 = scmp.lt.s32.totalorder %s225, 7
      %s230 = scalar_select %p229, %s225, 7
      %p231 = scmp.lt.s32.totalorder %s226, 1
      %s232 = scalar_select %p231, %s226, 1
      %s233 = smul.addr %s230, 2
      %s234 = sadd.s32 %s232, %s233
      %s235 = smul.addr %s228, 16
      %s236 = sadd.s32 %s234, %s235
      %s237 = smul.addr %s236, 4
      %s238 = scalar_lea.vmem %s2, %s237
      %s239 = smul.u32 %s20, 2
      %s240 = ssub.s32 0, %s239
      %s241 = smul.u32 %s18, %s240
      %s242 = sadd.s32 %s20, %s241
      %s243 = smul.u32 8, %s242
      %s244 = smul.u32 2, %s19
      %p245 = scmp.lt.s32.totalorder %s18, 1
      %s246 = scalar_select %p245, %s18, 1
      %p247 = scmp.lt.s32.totalorder %s243, 7
      %s248 = scalar_select %p247, %s243, 7
      %p249 = scmp.lt.s32.totalorder %s244, 1
      %s250 = scalar_select %p249, %s244, 1
      %s251 = smul.addr %s250, 3
      %s252 = smul.addr %s248, 6
      %s253 = sadd.s32 %s251, %s252
      %s254 = smul.addr %s246, 48
      %s255 = sadd.s32 %s253, %s254
      %s256 = smul.addr %s255, 4
      %s257 = scalar_lea.vmem %s0, %s256
      %s258 = smul.u32 %s20, 2
      %s259 = ssub.s32 0, %s258
      %s260 = smul.u32 %s18, %s259
      %s261 = sadd.s32 %s20, %s260
      %s262 = smul.u32 8, %s261
      %s263 = smul.u32 2, %s19
      %p264 = scmp.lt.s32.totalorder %s18, 1
      %s265 = scalar_select %p264, %s18, 1
      %s266 = smul.addr %s265, 48
      %s267 = smul.addr %s266, 4
      %s268 = scalar_lea.vmem %s1, %s267
      %s269 = smul.u32 %s20, 2
      %s270 = ssub.s32 0, %s269
      %s271 = smul.u32 %s18, %s270
      %s272 = sadd.s32 %s20, %s271
      %s273 = smul.u32 8, %s272
      %s274 = smul.u32 2, %s19
      %p275 = scmp.lt.s32.totalorder %s18, 1
      %s276 = scalar_select %p275, %s18, 1
      %p277 = scmp.lt.s32.totalorder %s273, 7
      %s278 = scalar_select %p277, %s273, 7
      %p279 = scmp.lt.s32.totalorder %s274, 1
      %s280 = scalar_select %p279, %s274, 1
      %s281 = smul.addr %s278, 2
      %s282 = sadd.s32 %s280, %s281
      %s283 = smul.addr %s276, 16
      %s284 = sadd.s32 %s282, %s283
      %s285 = smul.addr %s284, 4
      %s286 = scalar_lea.vmem %s2, %s285
      %s287 = smul.u32 %s20, 2
      %s288 = ssub.s32 0, %s287
      %s289 = smul.u32 %s18, %s288
      %s290 = sadd.s32 %s20, %s289
      %s291 = smul.u32 8, %s290
      %s292 = smul.u32 2, %s19
      %p294 = scmp.eq.s32.totalorder %s20, 0
      // Predicated region
      $region29: #{seq_to_seq_forward.2} parent=27 // pred_check
        %p295 = pneg %p294
      $region30: #{seq_to_seq_forward.2} parent=27 // pred_check_branch
        %297 = sbr.rel (%p295) target = $region32
      $region31: #{seq_to_seq_forward.2} parent=27 // pred_region
        %298 = vst [vmem:[#allocation2] sm:$0xff] 0.0
        %299 = vst [vmem:[#allocation2 + $0x8] sm:$0xff] 0.0
      $region32: #{seq_to_seq_forward.2} parent=27 // pred_fallthru
        _
      %v300 = vld [vmem:[%s268] sm:$0xff]
      %v301 = vld [vmem:[%s268 + $0x8] sm:$0xf]
      %v302 = vld [vmem:[%s268 + $0xc] sm:$0xff]
      %v303 = vld [vmem:[%s268 + $0x14] sm:$0xf]
      %v304 = vld [vmem:[%s268 + $0x18] sm:$0xff]
      %v305 = vld [vmem:[%s268 + $0x20] sm:$0xf]
      %v306 = vld [vmem:[%s268 + $0x24] sm:$0xff]
      %v307 = vld [vmem:[%s268 + $0x2c] sm:$0xf]
      %v308 = vld [vmem:[%s268 + $0x30] sm:$0xff]
      %v309 = vld [vmem:[%s268 + $0x38] sm:$0xf]
      %v310 = vld [vmem:[%s268 + $0x3c] sm:$0xff]
      %v311 = vld [vmem:[%s268 + $0x44] sm:$0xf]
      %v312 = vld [vmem:[%s268 + $0x48] sm:$0xff]
      %v313 = vld [vmem:[%s268 + $0x50] sm:$0xf]
      %v314 = vld [vmem:[%s268 + $0x54] sm:$0xff]
      %v315 = vld [vmem:[%s268 + $0x5c] sm:$0xf]
      %v316 = vld [vmem:[%s268 + $0x60] sm:$0xff]
      %v317 = vld [vmem:[%s268 + $0x68] sm:$0xf]
      %v318 = vld [vmem:[%s268 + $0x6c] sm:$0xff]
      %v319 = vld [vmem:[%s268 + $0x74] sm:$0xf]
      %v320 = vld [vmem:[%s268 + $0x78] sm:$0xff]
      %v321 = vld [vmem:[%s268 + $0x80] sm:$0xf]
      %v322 = vld [vmem:[%s268 + $0x84] sm:$0xff]
      %v323 = vld [vmem:[%s268 + $0x8c] sm:$0xf]
      %v324 = vld [vmem:[%s268 + $0x90] sm:$0xff]
      %v325 = vld [vmem:[%s268 + $0x98] sm:$0xf]
      %v326 = vld [vmem:[%s268 + $0x9c] sm:$0xff]
      %v327 = vld [vmem:[%s268 + $0xa4] sm:$0xf]
      %v328 = vld [vmem:[%s268 + $0xa8] sm:$0xff]
      %v329 = vld [vmem:[%s268 + $0xb0] sm:$0xf]
      %v330 = vld [vmem:[%s268 + $0xb4] sm:$0xff]
      %v331 = vld [vmem:[%s268 + $0xbc] sm:$0xf]
      %v332 = vld [vmem:[#allocation2] sm:$0xff]
      %v333 = vld [vmem:[#allocation2 + $0x8] sm:$0xff]
      %s334 = smul.u32 %s18, 7
      %s335 = smul.u32 %s334, 6
      %s336 = smul.addr %s335, 4
      %s337 = scalar_lea.vmem %s257, %s336
      %v338 = vld [vmem:[%s337] sm:$0xff]
      %v339 = vld [vmem:[%s337 + $0x8] sm:$0xf]
      %v340 = vld [vmem:[%s337 + $0xc] sm:$0xff]
      %v341 = vld [vmem:[%s337 + $0x14] sm:$0xf]
      %v342 = vunpack.c.l.bf16 %v338
      %v343 = vunpack.c.h.bf16 %v338
      %v344 = vunpack.c.l.bf16 %v339
      %v345 = vunpack.c.l.bf16 %v340
      %v346 = vunpack.c.h.bf16 %v340
      %v347 = vunpack.c.l.bf16 %v341
      %v348 = vpack.c.bf16 %v333, %v332
      %v381 = vunpack.c.l.b16 %v300
      %v382 = vunpack.c.h.b16 %v300
      %v383 = vunpack.c.l.b16 %v301
      %v384 = vunpack.c.l.b16 %v302
      %v385 = vunpack.c.h.b16 %v302
      %v386 = vunpack.c.l.b16 %v303
      %v387 = vunpack.c.l.b16 %v304
      %v388 = vunpack.c.h.b16 %v304
      %v389 = vunpack.c.l.b16 %v305
      %v390 = vunpack.c.l.b16 %v306
      %v391 = vunpack.c.h.b16 %v306
      %v392 = vunpack.c.l.b16 %v307
      %v393 = vunpack.c.l.b16 %v308
      %v394 = vunpack.c.h.b16 %v308
      %v395 = vunpack.c.l.b16 %v309
      %v396 = vunpack.c.l.b16 %v310
      %v397 = vunpack.c.h.b16 %v310
      %v398 = vunpack.c.l.b16 %v311
      %v399 = vunpack.c.l.b16 %v312
      %v400 = vunpack.c.h.b16 %v312
      %v401 = vunpack.c.l.b16 %v313
      %v402 = vunpack.c.l.b16 %v314
      %v403 = vunpack.c.h.b16 %v314
      %v404 = vunpack.c.l.b16 %v315
      %v405 = vunpack.c.l.b16 %v316
      %v406 = vunpack.c.h.b16 %v316
      %v407 = vunpack.c.l.b16 %v317
      %v408 = vunpack.c.l.b16 %v318
      %v409 = vunpack.c.h.b16 %v318
      %v410 = vunpack.c.l.b16 %v319
      %v411 = vunpack.c.l.b16 %v320
      %v412 = vunpack.c.h.b16 %v320
      %v413 = vunpack.c.l.b16 %v321
      %v414 = vunpack.c.l.b16 %v322
      %v415 = vunpack.c.h.b16 %v322
      %v416 = vunpack.c.l.b16 %v323
      %v417 = vunpack.c.l.b16 %v324
      %v418 = vunpack.c.h.b16 %v324
      %v419 = vunpack.c.l.b16 %v325
      %v420 = vunpack.c.l.b16 %v326
      %v421 = vunpack.c.h.b16 %v326
      %v422 = vunpack.c.l.b16 %v327
      %v423 = vunpack.c.l.b16 %v328
      %v424 = vunpack.c.h.b16 %v328
      %v425 = vunpack.c.l.b16 %v329
      %v426 = vunpack.c.l.b16 %v330
      %v427 = vunpack.c.h.b16 %v330
      %v428 = vunpack.c.l.b16 %v331
      %v429 = vpack.c.b16 %v384, %v381
      %v430 = vpack.c.b16 %v385, %v382
      %v431 = vpack.c.b16 %v386, %v383
      %v432 = vpack.c.b16 %v390, %v387
      %v433 = vpack.c.b16 %v391, %v388
      %v434 = vpack.c.b16 %v392, %v389
      %v435 = vpack.c.b16 %v396, %v393
      %v436 = vpack.c.b16 %v397, %v394
      %v437 = vpack.c.b16 %v398, %v395
      %v438 = vpack.c.b16 %v402, %v399
      %v439 = vpack.c.b16 %v403, %v400
      %v440 = vpack.c.b16 %v404, %v401
      %v441 = vpack.c.b16 %v408, %v405
      %v442 = vpack.c.b16 %v409, %v406
      %v443 = vpack.c.b16 %v410, %v407
      %v444 = vpack.c.b16 %v414, %v411
      %v445 = vpack.c.b16 %v415, %v412
      %v446 = vpack.c.b16 %v416, %v413
      %v447 = vpack.c.b16 %v420, %v417
      %v448 = vpack.c.b16 %v421, %v418
      %v449 = vpack.c.b16 %v422, %v419
      %v450 = vpack.c.b16 %v426, %v423
      %v451 = vpack.c.b16 %v427, %v424
      %v452 = vpack.c.b16 %v428, %v425
      %477 = vmatprep.subr.bf16.mxu0 %v430
      %478 = vmatpush1.bf16.msra.mxu0 %v429
      %479 = vmatprep.subr.bf16.mxu0 %v433
      %480 = vmatpush1.bf16.msra.mxu0 %v432
      %481 = vmatprep.subr.bf16.mxu0 %v436
      %482 = vmatpush1.bf16.msra.mxu0 %v435
      %483 = vmatprep.subr.bf16.mxu0 %v439
      %484 = vmatpush1.bf16.msra.mxu0 %v438
      %485 = vmatprep.subr.bf16.mxu0 %v442
      %486 = vmatpush1.bf16.msra.mxu0 %v441
      %487 = vmatprep.subr.bf16.mxu0 %v445
      %488 = vmatpush1.bf16.msra.mxu0 %v444
      %489 = vmatprep.subr.bf16.mxu0 %v448
      %490 = vmatpush1.bf16.msra.mxu0 %v447
      %491 = vmatprep.subr.bf16.mxu0 %v451
      %492 = vmatpush1.bf16.msra.mxu0 %v450
      %493 = vmatprep.subr.bf16.mxu0 0
      %494 = vmatpush1.bf16.msra.mxu0 0
      %495 = vmatprep.subr.bf16.mxu0 0
      %496 = vmatpush1.bf16.msra.mxu0 0
      %497 = vmatprep.subr.bf16.mxu0 0
      %498 = vmatpush1.bf16.msra.mxu0 0
      %499 = vmatprep.subr.bf16.mxu0 0
      %500 = vmatpush1.bf16.msra.mxu0 0
      %501 = vmatprep.subr.bf16.mxu0 0
      %502 = vmatpush1.bf16.msra.mxu0 0
      %503 = vmatprep.subr.bf16.mxu0 0
      %504 = vmatpush1.bf16.msra.mxu0 0
      %505 = vmatprep.subr.bf16.mxu0 0
      %506 = vmatpush1.bf16.msra.mxu0 0
      %507 = vmatprep.subr.bf16.mxu0 0
      %508 = vmatpush1.bf16.msra.mxu0 0
      %509 = vmatprep.mubr.bf16.mxu0 0
      %510 = vmatmul.mubr.bf16.gmra.mrb[0].mxu0 %v348
      %v511 = vpop.f32.mrb[0].mxu0
      %v512 = vadd.f32 0.0, %v511
      %v513 = vpop.f32.mrb[0].mxu0
      %v514 = vadd.f32 0.0, %v513
      %v515 = vpop.f32.mrb[0].mxu0
      %v516 = vadd.f32 0.0, %v515
      %v517 = vpop.f32.mrb[0].mxu0
      %v518 = vadd.f32 0.0, %v517
      %519 = vdwg.mxu0
      %520 = vmatprep.subr.bf16.mxu0 0
      %521 = vmatpush1.bf16.msra.mxu0 %v431
      %522 = vmatprep.subr.bf16.mxu0 0
      %523 = vmatpush1.bf16.msra.mxu0 %v434
      %524 = vmatprep.subr.bf16.mxu0 0
      %525 = vmatpush1.bf16.msra.mxu0 %v437
      %526 = vmatprep.subr.bf16.mxu0 0
      %527 = vmatpush1.bf16.msra.mxu0 %v440
      %528 = vmatprep.subr.bf16.mxu0 0
      %529 = vmatpush1.bf16.msra.mxu0 %v443
      %530 = vmatprep.subr.bf16.mxu0 0
      %531 = vmatpush1.bf16.msra.mxu0 %v446
      %532 = vmatprep.subr.bf16.mxu0 0
      %533 = vmatpush1.bf16.msra.mxu0 %v449
      %534 = vmatprep.subr.bf16.mxu0 0
      %535 = vmatpush1.bf16.msra.mxu0 %v452
      %536 = vmatprep.subr.bf16.mxu0 0
      %537 = vmatpush1.bf16.msra.mxu0 0
      %538 = vmatprep.subr.bf16.mxu0 0
      %539 = vmatpush1.bf16.msra.mxu0 0
      %540 = vmatprep.subr.bf16.mxu0 0
      %541 = vmatpush1.bf16.msra.mxu0 0
      %542 = vmatprep.subr.bf16.mxu0 0
      %543 = vmatpush1.bf16.msra.mxu0 0
      %544 = vmatprep.subr.bf16.mxu0 0
      %545 = vmatpush1.bf16.msra.mxu0 0
      %546 = vmatprep.subr.bf16.mxu0 0
      %547 = vmatpush1.bf16.msra.mxu0 0
      %548 = vmatprep.subr.bf16.mxu0 0
      %549 = vmatpush1.bf16.msra.mxu0 0
      %550 = vmatprep.subr.bf16.mxu0 0
      %551 = vmatpush1.bf16.msra.mxu0 0
      %552 = vmatprep.mubr.bf16.mxu0 0
      %553 = vmatmul.mubr.bf16.gmra.mrb[0].mxu0 %v348
      %v554 = vpop.f32.mrb[0].mxu0
      %v555 = vadd.f32 0.0, %v554
      %v556 = vpop.f32.mrb[0].mxu0
      %v557 = vpop.f32.mrb[0].mxu0
      %v558 = vadd.f32 0.0, %v557
      %v559 = vpop.f32.mrb[0].mxu0
      %560 = vdwg.mxu0
      %v561 = vadd.f32 %v342, %v512
      %v562 = vadd.f32 %v343, %v514
      %v563 = vadd.f32 %v345, %v516
      %v564 = vadd.f32 %v346, %v518
      %v565 = vxor.u32 %v561, 2147483648
      %v566 = vxor.u32 %v562, 2147483648
      %v567 = vxor.u32 %v563, 2147483648
      %v568 = vxor.u32 %v564, 2147483648
      %v569 = vmul.f32 %v565, 1.442695
      %v570 = vpow.pop %v569
      %v571 = vmul.f32 %v566, 1.442695
      %v572 = vpow.pop %v571
      %v573 = vmul.f32 %v567, 1.442695
      %v574 = vpow.pop %v573
      %v575 = vmul.f32 %v568, 1.442695
      %v576 = vpow.pop %v575
      %v577 = vadd.f32 %v570, 1.0
      %v578 = vadd.f32 %v572, 1.0
      %v579 = vadd.f32 %v574, 1.0
      %v580 = vadd.f32 %v576, 1.0
      %v581 = vrcp.pop %v577
      %v582 = vmul.f32 1.0, %v581
      %v583 = vrcp.pop %v578
      %v584 = vmul.f32 1.0, %v583
      %v585 = vrcp.pop %v579
      %v586 = vmul.f32 1.0, %v585
      %v587 = vrcp.pop %v580
      %v588 = vmul.f32 1.0, %v587
      %v589 = vmul.f32 %v582, %v555
      %v590 = vmul.f32 %v586, %v558
      %v591 = vadd.f32 %v344, %v589
      %v592 = vadd.f32 %v347, %v590
      %v593 = vtanh.pop %v591
      %v594 = vtanh.pop %v592
      %v595 = vsub.f32 %v332, %v593
      %v596 = vsub.f32 %v333, %v594
      %v597 = vmul.f32 %v584, %v595
      %v598 = vmul.f32 %v588, %v596
      %v599 = vadd.f32 %v593, %v597
      %v600 = vadd.f32 %v594, %v598
      %v601 = vpack.c.bf16 %v600, %v599
      %v603 = vunpack.c.l.b16 %v601
      %v604 = vunpack.c.h.b16 %v601
      %v605 = vpack.c.b16 %v603, %v603
      %v606 = vpack.c.b16 %v604, %v604
      %s609 = smul.u32 %s334, 2
      %s610 = smul.addr %s609, 4
      %s611 = scalar_lea.vmem %s286, %s610
      %612 = vst [vmem:[%s611] sm:$0xf] %v605
      %613 = vst [vmem:[%s611 + $0x4] sm:$0xf] %v606
      %s614 = smul.u32 %s18, 5
      %s615 = sadd.s32 %s614, 1
      %s616 = smul.u32 %s615, 6
      %s617 = smul.addr %s616, 4
      %s618 = scalar_lea.vmem %s257, %s617
      %v619 = vld [vmem:[%s618] sm:$0xff]
      %v620 = vld [vmem:[%s618 + $0x8] sm:$0xf]
      %v621 = vld [vmem:[%s618 + $0xc] sm:$0xff]
      %v622 = vld [vmem:[%s618 + $0x14] sm:$0xf]
      %v623 = vunpack.c.l.bf16 %v619
      %v624 = vunpack.c.h.bf16 %v619
      %v625 = vunpack.c.l.bf16 %v620
      %v626 = vunpack.c.l.bf16 %v621
      %v627 = vunpack.c.h.bf16 %v621
      %v628 = vunpack.c.l.bf16 %v622
      %629 = vmatprep.subr.bf16.mxu0 %v430
      %630 = vmatpush1.bf16.msra.mxu0 %v429
      %631 = vmatprep.subr.bf16.mxu0 %v433
      %632 = vmatpush1.bf16.msra.mxu0 %v432
      %633 = vmatprep.subr.bf16.mxu0 %v436
      %634 = vmatpush1.bf16.msra.mxu0 %v435
      %635 = vmatprep.subr.bf16.mxu0 %v439
      %636 = vmatpush1.bf16.msra.mxu0 %v438
      %637 = vmatprep.subr.bf16.mxu0 %v442
      %638 = vmatpush1.bf16.msra.mxu0 %v441
      %639 = vmatprep.subr.bf16.mxu0 %v445
      %640 = vmatpush1.bf16.msra.mxu0 %v444
      %641 = vmatprep.subr.bf16.mxu0 %v448
      %642 = vmatpush1.bf16.msra.mxu0 %v447
      %643 = vmatprep.subr.bf16.mxu0 %v451
      %644 = vmatpush1.bf16.msra.mxu0 %v450
      %645 = vmatprep.subr.bf16.mxu0 0
      %646 = vmatpush1.bf16.msra.mxu0 0
      %647 = vmatprep.subr.bf16.mxu0 0
      %648 = vmatpush1.bf16.msra.mxu0 0
      %649 = vmatprep.subr.bf16.mxu0 0
      %650 = vmatpush1.bf16.msra.mxu0 0
      %651 = vmatprep.subr.bf16.mxu0 0
      %652 = vmatpush1.bf16.msra.mxu0 0
      %653 = vmatprep.subr.bf16.mxu0 0
      %654 = vmatpush1.bf16.msra.mxu0 0
      %655 = vmatprep.subr.bf16.mxu0 0
      %656 = vmatpush1.bf16.msra.mxu0 0
      %657 = vmatprep.subr.bf16.mxu0 0
      %658 = vmatpush1.bf16.msra.mxu0 0
      %659 = vmatprep.subr.bf16.mxu0 0
      %660 = vmatpush1.bf16.msra.mxu0 0
      %661 = vmatprep.mubr.bf16.mxu0 0
      %662 = vmatmul.mubr.bf16.gmra.mrb[0].mxu0 %v601
      %v663 = vpop.f32.mrb[0].mxu0
      %v664 = vadd.f32 0.0, %v663
      %v665 = vpop.f32.mrb[0].mxu0
      %v666 = vadd.f32 0.0, %v665
      %v667 = vpop.f32.mrb[0].mxu0
      %v668 = vadd.f32 0.0, %v667
      %v669 = vpop.f32.mrb[0].mxu0
      %v670 = vadd.f32 0.0, %v669
      %671 = vdwg.mxu0
      %672 = vmatprep.subr.bf16.mxu0 0
      %673 = vmatpush1.bf16.msra.mxu0 %v431
      %674 = vmatprep.subr.bf16.mxu0 0
      %675 = vmatpush1.bf16.msra.mxu0 %v434
      %676 = vmatprep.subr.bf16.mxu0 0
      %677 = vmatpush1.bf16.msra.mxu0 %v437
      %678 = vmatprep.subr.bf16.mxu0 0
      %679 = vmatpush1.bf16.msra.mxu0 %v440
      %680 = vmatprep.subr.bf16.mxu0 0
      %681 = vmatpush1.bf16.msra.mxu0 %v443
      %682 = vmatprep.subr.bf16.mxu0 0
      %683 = vmatpush1.bf16.msra.mxu0 %v446
      %684 = vmatprep.subr.bf16.mxu0 0
      %685 = vmatpush1.bf16.msra.mxu0 %v449
      %686 = vmatprep.subr.bf16.mxu0 0
      %687 = vmatpush1.bf16.msra.mxu0 %v452
      %688 = vmatprep.subr.bf16.mxu0 0
      %689 = vmatpush1.bf16.msra.mxu0 0
      %690 = vmatprep.subr.bf16.mxu0 0
      %691 = vmatpush1.bf16.msra.mxu0 0
      %692 = vmatprep.subr.bf16.mxu0 0
      %693 = vmatpush1.bf16.msra.mxu0 0
      %694 = vmatprep.subr.bf16.mxu0 0
      %695 = vmatpush1.bf16.msra.mxu0 0
      %696 = vmatprep.subr.bf16.mxu0 0
      %697 = vmatpush1.bf16.msra.mxu0 0
      %698 = vmatprep.subr.bf16.mxu0 0
      %699 = vmatpush1.bf16.msra.mxu0 0
      %700 = vmatprep.subr.bf16.mxu0 0
      %701 = vmatpush1.bf16.msra.mxu0 0
      %702 = vmatprep.subr.bf16.mxu0 0
      %703 = vmatpush1.bf16.msra.mxu0 0
      %704 = vmatprep.mubr.bf16.mxu0 0
      %705 = vmatmul.mubr.bf16.gmra.mrb[0].mxu0 %v601
      %v706 = vpop.f32.mrb[0].mxu0
      %v707 = vadd.f32 0.0, %v706
      %v708 = vpop.f32.mrb[0].mxu0
      %v709 = vpop.f32.mrb[0].mxu0
      %v710 = vadd.f32 0.0, %v709
      %v711 = vpop.f32.mrb[0].mxu0
      %712 = vdwg.mxu0
      %v713 = vadd.f32 %v623, %v664
      %v714 = vadd.f32 %v624, %v666
      %v715 = vadd.f32 %v626, %v668
      %v716 = vadd.f32 %v627, %v670
      %v717 = vxor.u32 %v713, 2147483648
      %v718 = vxor.u32 %v714, 2147483648
      %v719 = vxor.u32 %v715, 2147483648
      %v720 = vxor.u32 %v716, 2147483648
      %v721 = vmul.f32 %v717, 1.442695
      %v722 = vpow.pop %v721
      %v723 = vmul.f32 %v718, 1.442695
      %v724 = vpow.pop %v723
      %v725 = vmul.f32 %v719, 1.442695
      %v726 = vpow.pop %v725
      %v727 = vmul.f32 %v720, 1.442695
      %v728 = vpow.pop %v727
      %v729 = vadd.f32 %v722, 1.0
      %v730 = vadd.f32 %v724, 1.0
      %v731 = vadd.f32 %v726, 1.0
      %v732 = vadd.f32 %v728, 1.0
      %v733 = vrcp.pop %v729
      %v734 = vmul.f32 1.0, %v733
      %v735 = vrcp.pop %v730
      %v736 = vmul.f32 1.0, %v735
      %v737 = vrcp.pop %v731
      %v738 = vmul.f32 1.0, %v737
      %v739 = vrcp.pop %v732
      %v740 = vmul.f32 1.0, %v739
      %v741 = vmul.f32 %v734, %v707
      %v742 = vmul.f32 %v738, %v710
      %v743 = vadd.f32 %v625, %v741
      %v744 = vadd.f32 %v628, %v742
      %v745 = vtanh.pop %v743
      %v746 = vtanh.pop %v744
      %v747 = vsub.f32 %v599, %v745
      %v748 = vsub.f32 %v600, %v746
      %v749 = vmul.f32 %v736, %v747
      %v750 = vmul.f32 %v740, %v748
      %v751 = vadd.f32 %v745, %v749
      %v752 = vadd.f32 %v746, %v750
      %v753 = vpack.c.bf16 %v752, %v751
      %v755 = vunpack.c.l.b16 %v753
      %v756 = vunpack.c.h.b16 %v753
      %v757 = vpack.c.b16 %v755, %v755
      %v758 = vpack.c.b16 %v756, %v756
      %s761 = smul.u32 %s615, 2
      %s762 = smul.addr %s761, 4
      %s763 = scalar_lea.vmem %s286, %s762
      %764 = vst [vmem:[%s763] sm:$0xf] %v757
      %765 = vst [vmem:[%s763 + $0x4] sm:$0xf] %v758
      %s766 = smul.u32 %s18, 3
      %s767 = sadd.s32 %s766, 2
      %s768 = smul.u32 %s767, 6
      %s769 = smul.addr %s768, 4
      %s770 = scalar_lea.vmem %s257, %s769
      %v771 = vld [vmem:[%s770] sm:$0xff]
      %v772 = vld [vmem:[%s770 + $0x8] sm:$0xf]
      %v773 = vld [vmem:[%s770 + $0xc] sm:$0xff]
      %v774 = vld [vmem:[%s770 + $0x14] sm:$0xf]
      %v775 = vunpack.c.l.bf16 %v771
      %v776 = vunpack.c.h.bf16 %v771
      %v777 = vunpack.c.l.bf16 %v772
      %v778 = vunpack.c.l.bf16 %v773
      %v779 = vunpack.c.h.bf16 %v773
      %v780 = vunpack.c.l.bf16 %v774
      %781 = vmatprep.subr.bf16.mxu0 %v430
      %782 = vmatpush1.bf16.msra.mxu0 %v429
      %783 = vmatprep.subr.bf16.mxu0 %v433
      %784 = vmatpush1.bf16.msra.mxu0 %v432
      %785 = vmatprep.subr.bf16.mxu0 %v436
      %786 = vmatpush1.bf16.msra.mxu0 %v435
      %787 = vmatprep.subr.bf16.mxu0 %v439
      %788 = vmatpush1.bf16.msra.mxu0 %v438
      %789 = vmatprep.subr.bf16.mxu0 %v442
      %790 = vmatpush1.bf16.msra.mxu0 %v441
      %791 = vmatprep.subr.bf16.mxu0 %v445
      %792 = vmatpush1.bf16.msra.mxu0 %v444
      %793 = vmatprep.subr.bf16.mxu0 %v448
      %794 = vmatpush1.bf16.msra.mxu0 %v447
      %795 = vmatprep.subr.bf16.mxu0 %v451
      %796 = vmatpush1.bf16.msra.mxu0 %v450
      %797 = vmatprep.subr.bf16.mxu0 0
      %798 = vmatpush1.bf16.msra.mxu0 0
      %799 = vmatprep.subr.bf16.mxu0 0
      %800 = vmatpush1.bf16.msra.mxu0 0
      %801 = vmatprep.subr.bf16.mxu0 0
      %802 = vmatpush1.bf16.msra.mxu0 0
      %803 = vmatprep.subr.bf16.mxu0 0
      %804 = vmatpush1.bf16.msra.mxu0 0
      %805 = vmatprep.subr.bf16.mxu0 0
      %806 = vmatpush1.bf16.msra.mxu0 0
      %807 = vmatprep.subr.bf16.mxu0 0
      %808 = vmatpush1.bf16.msra.mxu0 0
      %809 = vmatprep.subr.bf16.mxu0 0
      %810 = vmatpush1.bf16.msra.mxu0 0
      %811 = vmatprep.subr.bf16.mxu0 0
      %812 = vmatpush1.bf16.msra.mxu0 0
      %813 = vmatprep.mubr.bf16.mxu0 0
      %814 = vmatmul.mubr.bf16.gmra.mrb[0].mxu0 %v753
      %v815 = vpop.f32.mrb[0].mxu0
      %v816 = vadd.f32 0.0, %v815
      %v817 = vpop.f32.mrb[0].mxu0
      %v818 = vadd.f32 0.0, %v817
      %v819 = vpop.f32.mrb[0].mxu0
      %v820 = vadd.f32 0.0, %v819
      %v821 = vpop.f32.mrb[0].mxu0
      %v822 = vadd.f32 0.0, %v821
      %823 = vdwg.mxu0
      %824 = vmatprep.subr.bf16.mxu0 0
      %825 = vmatpush1.bf16.msra.mxu0 %v431
      %826 = vmatprep.subr.bf16.mxu0 0
      %827 = vmatpush1.bf16.msra.mxu0 %v434
      %828 = vmatprep.subr.bf16.mxu0 0
      %829 = vmatpush1.bf16.msra.mxu0 %v437
      %830 = vmatprep.subr.bf16.mxu0 0
      %831 = vmatpush1.bf16.msra.mxu0 %v440
      %832 = vmatprep.subr.bf16.mxu0 0
      %833 = vmatpush1.bf16.msra.mxu0 %v443
      %834 = vmatprep.subr.bf16.mxu0 0
      %835 = vmatpush1.bf16.msra.mxu0 %v446
      %836 = vmatprep.subr.bf16.mxu0 0
      %837 = vmatpush1.bf16.msra.mxu0 %v449
      %838 = vmatprep.subr.bf16.mxu0 0
      %839 = vmatpush1.bf16.msra.mxu0 %v452
      %840 = vmatprep.subr.bf16.mxu0 0
      %841 = vmatpush1.bf16.msra.mxu0 0
      %842 = vmatprep.subr.bf16.mxu0 0
      %843 = vmatpush1.bf16.msra.mxu0 0
      %844 = vmatprep.subr.bf16.mxu0 0
      %845 = vmatpush1.bf16.msra.mxu0 0
      %846 = vmatprep.subr.bf16.mxu0 0
      %847 = vmatpush1.bf16.msra.mxu0 0
      %848 = vmatprep.subr.bf16.mxu0 0
      %849 = vmatpush1.bf16.msra.mxu0 0
      %850 = vmatprep.subr.bf16.mxu0 0
      %851 = vmatpush1.bf16.msra.mxu0 0
      %852 = vmatprep.subr.bf16.mxu0 0
      %853 = vmatpush1.bf16.msra.mxu0 0
      %854 = vmatprep.subr.bf16.mxu0 0
      %855 = vmatpush1.bf16.msra.mxu0 0
      %856 = vmatprep.mubr.bf16.mxu0 0
      %857 = vmatmul.mubr.bf16.gmra.mrb[0].mxu0 %v753
      %v858 = vpop.f32.mrb[0].mxu0
      %v859 = vadd.f32 0.0, %v858
      %v860 = vpop.f32.mrb[0].mxu0
      %v861 = vpop.f32.mrb[0].mxu0
      %v862 = vadd.f32 0.0, %v861
      %v863 = vpop.f32.mrb[0].mxu0
      %864 = vdwg.mxu0
      %v865 = vadd.f32 %v775, %v816
      %v866 = vadd.f32 %v776, %v818
      %v867 = vadd.f32 %v778, %v820
      %v868 = vadd.f32 %v779, %v822
      %v869 = vxor.u32 %v865, 2147483648
      %v870 = vxor.u32 %v866, 2147483648
      %v871 = vxor.u32 %v867, 2147483648
      %v872 = vxor.u32 %v868, 2147483648
      %v873 = vmul.f32 %v869, 1.442695
      %v874 = vpow.pop %v873
      %v875 = vmul.f32 %v870, 1.442695
      %v876 = vpow.pop %v875
      %v877 = vmul.f32 %v871, 1.442695
      %v878 = vpow.pop %v877
      %v879 = vmul.f32 %v872, 1.442695
      %v880 = vpow.pop %v879
      %v881 = vadd.f32 %v874, 1.0
      %v882 = vadd.f32 %v876, 1.0
      %v883 = vadd.f32 %v878, 1.0
      %v884 = vadd.f32 %v880, 1.0
      %v885 = vrcp.pop %v881
      %v886 = vmul.f32 1.0, %v885
      %v887 = vrcp.pop %v882
      %v888 = vmul.f32 1.0, %v887
      %v889 = vrcp.pop %v883
      %v890 = vmul.f32 1.0, %v889
      %v891 = vrcp.pop %v884
      %v892 = vmul.f32 1.0, %v891
      %v893 = vmul.f32 %v886, %v859
      %v894 = vmul.f32 %v890, %v862
      %v895 = vadd.f32 %v777, %v893
      %v896 = vadd.f32 %v780, %v894
      %v897 = vtanh.pop %v895
      %v898 = vtanh.pop %v896
      %v899 = vsub.f32 %v751, %v897
      %v900 = vsub.f32 %v752, %v898
      %v901 = vmul.f32 %v888, %v899
      %v902 = vmul.f32 %v892, %v900
      %v903 = vadd.f32 %v897, %v901
      %v904 = vadd.f32 %v898, %v902
      %v905 = vpack.c.bf16 %v904, %v903
      %v907 = vunpack.c.l.b16 %v905
      %v908 = vunpack.c.h.b16 %v905
      %v909 = vpack.c.b16 %v907, %v907
      %v910 = vpack.c.b16 %v908, %v908
      %s913 = smul.u32 %s767, 2
      %s914 = smul.addr %s913, 4
      %s915 = scalar_lea.vmem %s286, %s914
      %916 = vst [vmem:[%s915] sm:$0xf] %v909
      %917 = vst [vmem:[%s915 + $0x4] sm:$0xf] %v910
      %s918 = sadd.s32 %s18, 3
      %s919 = smul.u32 %s918, 6
      %s920 = smul.addr %s919, 4
      %s921 = scalar_lea.vmem %s257, %s920
      %v922 = vld [vmem:[%s921] sm:$0xff]
      %v923 = vld [vmem:[%s921 + $0x8] sm:$0xf]
      %v924 = vld [vmem:[%s921 + $0xc] sm:$0xff]
      %v925 = vld [vmem:[%s921 + $0x14] sm:$0xf]
      %v926 = vunpack.c.l.bf16 %v922
      %v927 = vunpack.c.h.bf16 %v922
      %v928 = vunpack.c.l.bf16 %v923
      %v929 = vunpack.c.l.bf16 %v924
      %v930 = vunpack.c.h.bf16 %v924
      %v931 = vunpack.c.l.bf16 %v925
      %932 = vmatprep.subr.bf16.mxu0 %v430
      %933 = vmatpush1.bf16.msra.mxu0 %v429
      %934 = vmatprep.subr.bf16.mxu0 %v433
      %935 = vmatpush1.bf16.msra.mxu0 %v432
      %936 = vmatprep.subr.bf16.mxu0 %v436
      %937 = vmatpush1.bf16.msra.mxu0 %v435
      %938 = vmatprep.subr.bf16.mxu0 %v439
      %939 = vmatpush1.bf16.msra.mxu0 %v438
      %940 = vmatprep.subr.bf16.mxu0 %v442
      %941 = vmatpush1.bf16.msra.mxu0 %v441
      %942 = vmatprep.subr.bf16.mxu0 %v445
      %943 = vmatpush1.bf16.msra.mxu0 %v444
      %944 = vmatprep.subr.bf16.mxu0 %v448
      %945 = vmatpush1.bf16.msra.mxu0 %v447
      %946 = vmatprep.subr.bf16.mxu0 %v451
      %947 = vmatpush1.bf16.msra.mxu0 %v450
      %948 = vmatprep.subr.bf16.mxu0 0
      %949 = vmatpush1.bf16.msra.mxu0 0
      %950 = vmatprep.subr.bf16.mxu0 0
      %951 = vmatpush1.bf16.msra.mxu0 0
      %952 = vmatprep.subr.bf16.mxu0 0
      %953 = vmatpush1.bf16.msra.mxu0 0
      %954 = vmatprep.subr.bf16.mxu0 0
      %955 = vmatpush1.bf16.msra.mxu0 0
      %956 = vmatprep.subr.bf16.mxu0 0
      %957 = vmatpush1.bf16.msra.mxu0 0
      %958 = vmatprep.subr.bf16.mxu0 0
      %959 = vmatpush1.bf16.msra.mxu0 0
      %960 = vmatprep.subr.bf16.mxu0 0
      %961 = vmatpush1.bf16.msra.mxu0 0
      %962 = vmatprep.subr.bf16.mxu0 0
      %963 = vmatpush1.bf16.msra.mxu0 0
      %964 = vmatprep.mubr.bf16.mxu0 0
      %965 = vmatmul.mubr.bf16.gmra.mrb[0].mxu0 %v905
      %v966 = vpop.f32.mrb[0].mxu0
      %v967 = vadd.f32 0.0, %v966
      %v968 = vpop.f32.mrb[0].mxu0
      %v969 = vadd.f32 0.0, %v968
      %v970 = vpop.f32.mrb[0].mxu0
      %v971 = vadd.f32 0.0, %v970
      %v972 = vpop.f32.mrb[0].mxu0
      %v973 = vadd.f32 0.0, %v972
      %974 = vdwg.mxu0
      %975 = vmatprep.subr.bf16.mxu0 0
      %976 = vmatpush1.bf16.msra.mxu0 %v431
      %977 = vmatprep.subr.bf16.mxu0 0
      %978 = vmatpush1.bf16.msra.mxu0 %v434
      %979 = vmatprep.subr.bf16.mxu0 0
      %980 = vmatpush1.bf16.msra.mxu0 %v437
      %981 = vmatprep.subr.bf16.mxu0 0
      %982 = vmatpush1.bf16.msra.mxu0 %v440
      %983 = vmatprep.subr.bf16.mxu0 0
      %984 = vmatpush1.bf16.msra.mxu0 %v443
      %985 = vmatprep.subr.bf16.mxu0 0
      %986 = vmatpush1.bf16.msra.mxu0 %v446
      %987 = vmatprep.subr.bf16.mxu0 0
      %988 = vmatpush1.bf16.msra.mxu0 %v449
      %989 = vmatprep.subr.bf16.mxu0 0
      %990 = vmatpush1.bf16.msra.mxu0 %v452
      %991 = vmatprep.subr.bf16.mxu0 0
      %992 = vmatpush1.bf16.msra.mxu0 0
      %993 = vmatprep.subr.bf16.mxu0 0
      %994 = vmatpush1.bf16.msra.mxu0 0
      %995 = vmatprep.subr.bf16.mxu0 0
      %996 = vmatpush1.bf16.msra.mxu0 0
      %997 = vmatprep.subr.bf16.mxu0 0
      %998 = vmatpush1.bf16.msra.mxu0 0
      %999 = vmatprep.subr.bf16.mxu0 0
      %1000 = vmatpush1.bf16.msra.mxu0 0
      %1001 = vmatprep.subr.bf16.mxu0 0
      %1002 = vmatpush1.bf16.msra.mxu0 0
      %1003 = vmatprep.subr.bf16.mxu0 0
      %1004 = vmatpush1.bf16.msra.mxu0 0
      %1005 = vmatprep.subr.bf16.mxu0 0
      %1006 = vmatpush1.bf16.msra.mxu0 0
      %1007 = vmatprep.mubr.bf16.mxu0 0
      %1008 = vmatmul.mubr.bf16.gmra.mrb[0].mxu0 %v905
      %v1009 = vpop.f32.mrb[0].mxu0
      %v1010 = vadd.f32 0.0, %v1009
      %v1011 = vpop.f32.mrb[0].mxu0
      %v1012 = vpop.f32.mrb[0].mxu0
      %v1013 = vadd.f32 0.0, %v1012
      %v1014 = vpop.f32.mrb[0].mxu0
      %1015 = vdwg.mxu0
      %v1016 = vadd.f32 %v926, %v967
      %v1017 = vadd.f32 %v927, %v969
      %v1018 = vadd.f32 %v929, %v971
      %v1019 = vadd.f32 %v930, %v973
      %v1020 = vxor.u32 %v1016, 2147483648
      %v1021 = vxor.u32 %v1017, 2147483648
      %v1022 = vxor.u32 %v1018, 2147483648
      %v1023 = vxor.u32 %v1019, 2147483648
      %v1024 = vmul.f32 %v1020, 1.442695
      %v1025 = vpow.pop %v1024
      %v1026 = vmul.f32 %v1021, 1.442695
      %v1027 = vpow.pop %v1026
      %v1028 = vmul.f32 %v1022, 1.442695
      %v1029 = vpow.pop %v1028
      %v1030 = vmul.f32 %v1023, 1.442695
      %v1031 = vpow.pop %v1030
      %v1032 = vadd.f32 %v1025, 1.0
      %v1033 = vadd.f32 %v1027, 1.0
      %v1034 = vadd.f32 %v1029, 1.0
      %v1035 = vadd.f32 %v1031, 1.0
      %v1036 = vrcp.pop %v1032
      %v1037 = vmul.f32 1.0, %v1036
      %v1038 = vrcp.pop %v1033
      %v1039 = vmul.f32 1.0, %v1038
      %v1040 = vrcp.pop %v1034
      %v1041 = vmul.f32 1.0, %v1040
      %v1042 = vrcp.pop %v1035
      %v1043 = vmul.f32 1.0, %v1042
      %v1044 = vmul.f32 %v1037, %v1010
      %v1045 = vmul.f32 %v1041, %v1013
      %v1046 = vadd.f32 %v928, %v1044
      %v1047 = vadd.f32 %v931, %v1045
      %v1048 = vtanh.pop %v1046
      %v1049 = vtanh.pop %v1047
      %v1050 = vsub.f32 %v903, %v1048
      %v1051 = vsub.f32 %v904, %v1049
      %v1052 = vmul.f32 %v1039, %v1050
      %v1053 = vmul.f32 %v1043, %v1051
      %v1054 = vadd.f32 %v1048, %v1052
      %v1055 = vadd.f32 %v1049, %v1053
      %v1056 = vpack.c.bf16 %v1055, %v1054
      %v1058 = vunpack.c.l.b16 %v1056
      %v1059 = vunpack.c.h.b16 %v1056
      %v1060 = vpack.c.b16 %v1058, %v1058
      %v1061 = vpack.c.b16 %v1059, %v1059
      %s1064 = smul.u32 %s918, 2
      %s1065 = smul.addr %s1064, 4
      %s1066 = scalar_lea.vmem %s286, %s1065
      %1067 = vst [vmem:[%s1066] sm:$0xf] %v1060
      %1068 = vst [vmem:[%s1066 + $0x4] sm:$0xf] %v1061
      %s1069 = ssub.s32 4, %s18
      %s1070 = smul.u32 %s1069, 6
      %s1071 = smul.addr %s1070, 4
      %s1072 = scalar_lea.vmem %s257, %s1071
      %v1073 = vld [vmem:[%s1072] sm:$0xff]
      %v1074 = vld [vmem:[%s1072 + $0x8] sm:$0xf]
      %v1075 = vld [vmem:[%s1072 + $0xc] sm:$0xff]
      %v1076 = vld [vmem:[%s1072 + $0x14] sm:$0xf]
      %v1077 = vunpack.c.l.bf16 %v1073
      %v1078 = vunpack.c.h.bf16 %v1073
      %v1079 = vunpack.c.l.bf16 %v1074
      %v1080 = vunpack.c.l.bf16 %v1075
      %v1081 = vunpack.c.h.bf16 %v1075
      %v1082 = vunpack.c.l.bf16 %v1076
      %1083 = vmatprep.subr.bf16.mxu0 %v430
      %1084 = vmatpush1.bf16.msra.mxu0 %v429
      %1085 = vmatprep.subr.bf16.mxu0 %v433
      %1086 = vmatpush1.bf16.msra.mxu0 %v432
      %1087 = vmatprep.subr.bf16.mxu0 %v436
      %1088 = vmatpush1.bf16.msra.mxu0 %v435
      %1089 = vmatprep.subr.bf16.mxu0 %v439
      %1090 = vmatpush1.bf16.msra.mxu0 %v438
      %1091 = vmatprep.subr.bf16.mxu0 %v442
      %1092 = vmatpush1.bf16.msra.mxu0 %v441
      %1093 = vmatprep.subr.bf16.mxu0 %v445
      %1094 = vmatpush1.bf16.msra.mxu0 %v444
      %1095 = vmatprep.subr.bf16.mxu0 %v448
      %1096 = vmatpush1.bf16.msra.mxu0 %v447
      %1097 = vmatprep.subr.bf16.mxu0 %v451
      %1098 = vmatpush1.bf16.msra.mxu0 %v450
      %1099 = vmatprep.subr.bf16.mxu0 0
      %1100 = vmatpush1.bf16.msra.mxu0 0
      %1101 = vmatprep.subr.bf16.mxu0 0
      %1102 = vmatpush1.bf16.msra.mxu0 0
      %1103 = vmatprep.subr.bf16.mxu0 0
      %1104 = vmatpush1.bf16.msra.mxu0 0
      %1105 = vmatprep.subr.bf16.mxu0 0
      %1106 = vmatpush1.bf16.msra.mxu0 0
      %1107 = vmatprep.subr.bf16.mxu0 0
      %1108 = vmatpush1.bf16.msra.mxu0 0
      %1109 = vmatprep.subr.bf16.mxu0 0
      %1110 = vmatpush1.bf16.msra.mxu0 0
      %1111 = vmatprep.subr.bf16.mxu0 0
      %1112 = vmatpush1.bf16.msra.mxu0 0
      %1113 = vmatprep.subr.bf16.mxu0 0
      %1114 = vmatpush1.bf16.msra.mxu0 0
      %1115 = vmatprep.mubr.bf16.mxu0 0
      %1116 = vmatmul.mubr.bf16.gmra.mrb[0].mxu0 %v1056
      %v1117 = vpop.f32.mrb[0].mxu0
      %v1118 = vadd.f32 0.0, %v1117
      %v1119 = vpop.f32.mrb[0].mxu0
      %v1120 = vadd.f32 0.0, %v1119
      %v1121 = vpop.f32.mrb[0].mxu0
      %v1122 = vadd.f32 0.0, %v1121
      %v1123 = vpop.f32.mrb[0].mxu0
      %v1124 = vadd.f32 0.0, %v1123
      %1125 = vdwg.mxu0
      %1126 = vmatprep.subr.bf16.mxu0 0
      %1127 = vmatpush1.bf16.msra.mxu0 %v431
      %1128 = vmatprep.subr.bf16.mxu0 0
      %1129 = vmatpush1.bf16.msra.mxu0 %v434
      %1130 = vmatprep.subr.bf16.mxu0 0
      %1131 = vmatpush1.bf16.msra.mxu0 %v437
      %1132 = vmatprep.subr.bf16.mxu0 0
      %1133 = vmatpush1.bf16.msra.mxu0 %v440
      %1134 = vmatprep.subr.bf16.mxu0 0
      %1135 = vmatpush1.bf16.msra.mxu0 %v443
      %1136 = vmatprep.subr.bf16.mxu0 0
      %1137 = vmatpush1.bf16.msra.mxu0 %v446
      %1138 = vmatprep.subr.bf16.mxu0 0
      %1139 = vmatpush1.bf16.msra.mxu0 %v449
      %1140 = vmatprep.subr.bf16.mxu0 0
      %1141 = vmatpush1.bf16.msra.mxu0 %v452
      %1142 = vmatprep.subr.bf16.mxu0 0
      %1143 = vmatpush1.bf16.msra.mxu0 0
      %1144 = vmatprep.subr.bf16.mxu0 0
      %1145 = vmatpush1.bf16.msra.mxu0 0
      %1146 = vmatprep.subr.bf16.mxu0 0
      %1147 = vmatpush1.bf16.msra.mxu0 0
      %1148 = vmatprep.subr.bf16.mxu0 0
      %1149 = vmatpush1.bf16.msra.mxu0 0
      %1150 = vmatprep.subr.bf16.mxu0 0
      %1151 = vmatpush1.bf16.msra.mxu0 0
      %1152 = vmatprep.subr.bf16.mxu0 0
      %1153 = vmatpush1.bf16.msra.mxu0 0
      %1154 = vmatprep.subr.bf16.mxu0 0
      %1155 = vmatpush1.bf16.msra.mxu0 0
      %1156 = vmatprep.subr.bf16.mxu0 0
      %1157 = vmatpush1.bf16.msra.mxu0 0
      %1158 = vmatprep.mubr.bf16.mxu0 0
      %1159 = vmatmul.mubr.bf16.gmra.mrb[0].mxu0 %v1056
      %v1160 = vpop.f32.mrb[0].mxu0
      %v1161 = vadd.f32 0.0, %v1160
      %v1162 = vpop.f32.mrb[0].mxu0
      %v1163 = vpop.f32.mrb[0].mxu0
      %v1164 = vadd.f32 0.0, %v1163
      %v1165 = vpop.f32.mrb[0].mxu0
      %1166 = vdwg.mxu0
      %v1167 = vadd.f32 %v1077, %v1118
      %v1168 = vadd.f32 %v1078, %v1120
      %v1169 = vadd.f32 %v1080, %v1122
      %v1170 = vadd.f32 %v1081, %v1124
      %v1171 = vxor.u32 %v1167, 2147483648
      %v1172 = vxor.u32 %v1168, 2147483648
      %v1173 = vxor.u32 %v1169, 2147483648
      %v1174 = vxor.u32 %v1170, 2147483648
      %v1175 = vmul.f32 %v1171, 1.442695
      %v1176 = vpow.pop %v1175
      %v1177 = vmul.f32 %v1172, 1.442695
      %v1178 = vpow.pop %v1177
      %v1179 = vmul.f32 %v1173, 1.442695
      %v1180 = vpow.pop %v1179
      %v1181 = vmul.f32 %v1174, 1.442695
      %v1182 = vpow.pop %v1181
      %v1183 = vadd.f32 %v1176, 1.0
      %v1184 = vadd.f32 %v1178, 1.0
      %v1185 = vadd.f32 %v1180, 1.0
      %v1186 = vadd.f32 %v1182, 1.0
      %v1187 = vrcp.pop %v1183
      %v1188 = vmul.f32 1.0, %v1187
      %v1189 = vrcp.pop %v1184
      %v1190 = vmul.f32 1.0, %v1189
      %v1191 = vrcp.pop %v1185
      %v1192 = vmul.f32 1.0, %v1191
      %v1193 = vrcp.pop %v1186
      %v1194 = vmul.f32 1.0, %v1193
      %v1195 = vmul.f32 %v1188, %v1161
      %v1196 = vmul.f32 %v1192, %v1164
      %v1197 = vadd.f32 %v1079, %v1195
      %v1198 = vadd.f32 %v1082, %v1196
      %v1199 = vtanh.pop %v1197
      %v1200 = vtanh.pop %v1198
      %v1201 = vsub.f32 %v1054, %v1199
      %v1202 = vsub.f32 %v1055, %v1200
      %v1203 = vmul.f32 %v1190, %v1201
      %v1204 = vmul.f32 %v1194, %v1202
      %v1205 = vadd.f32 %v1199, %v1203
      %v1206 = vadd.f32 %v1200, %v1204
      %v1207 = vpack.c.bf16 %v1206, %v1205
      %v1209 = vunpack.c.l.b16 %v1207
      %v1210 = vunpack.c.h.b16 %v1207
      %v1211 = vpack.c.b16 %v1209, %v1209
      %v1212 = vpack.c.b16 %v1210, %v1210
      %s1215 = smul.u32 %s1069, 2
      %s1216 = smul.addr %s1215, 4
      %s1217 = scalar_lea.vmem %s286, %s1216
      %1218 = vst [vmem:[%s1217] sm:$0xf] %v1211
      %1219 = vst [vmem:[%s1217 + $0x4] sm:$0xf] %v1212
      %s1220 = smul.u32 %s18, 4294967293
      %s1221 = sadd.s32 %s1220, 5
      %s1222 = smul.u32 %s1221, 6
      %s1223 = smul.addr %s1222, 4
      %s1224 = scalar_lea.vmem %s257, %s1223
      %v1225 = vld [vmem:[%s1224] sm:$0xff]
      %v1226 = vld [vmem:[%s1224 + $0x8] sm:$0xf]
      %v1227 = vld [vmem:[%s1224 + $0xc] sm:$0xff]
      %v1228 = vld [vmem:[%s1224 + $0x14] sm:$0xf]
      %v1229 = vunpack.c.l.bf16 %v1225
      %v1230 = vunpack.c.h.bf16 %v1225
      %v1231 = vunpack.c.l.bf16 %v1226
      %v1232 = vunpack.c.l.bf16 %v1227
      %v1233 = vunpack.c.h.bf16 %v1227
      %v1234 = vunpack.c.l.bf16 %v1228
      %1235 = vmatprep.subr.bf16.mxu0 %v430
      %1236 = vmatpush1.bf16.msra.mxu0 %v429
      %1237 = vmatprep.subr.bf16.mxu0 %v433
      %1238 = vmatpush1.bf16.msra.mxu0 %v432
      %1239 = vmatprep.subr.bf16.mxu0 %v436
      %1240 = vmatpush1.bf16.msra.mxu0 %v435
      %1241 = vmatprep.subr.bf16.mxu0 %v439
      %1242 = vmatpush1.bf16.msra.mxu0 %v438
      %1243 = vmatprep.subr.bf16.mxu0 %v442
      %1244 = vmatpush1.bf16.msra.mxu0 %v441
      %1245 = vmatprep.subr.bf16.mxu0 %v445
      %1246 = vmatpush1.bf16.msra.mxu0 %v444
      %1247 = vmatprep.subr.bf16.mxu0 %v448
      %1248 = vmatpush1.bf16.msra.mxu0 %v447
      %1249 = vmatprep.subr.bf16.mxu0 %v451
      %1250 = vmatpush1.bf16.msra.mxu0 %v450
      %1251 = vmatprep.subr.bf16.mxu0 0
      %1252 = vmatpush1.bf16.msra.mxu0 0
      %1253 = vmatprep.subr.bf16.mxu0 0
      %1254 = vmatpush1.bf16.msra.mxu0 0
      %1255 = vmatprep.subr.bf16.mxu0 0
      %1256 = vmatpush1.bf16.msra.mxu0 0
      %1257 = vmatprep.subr.bf16.mxu0 0
      %1258 = vmatpush1.bf16.msra.mxu0 0
      %1259 = vmatprep.subr.bf16.mxu0 0
      %1260 = vmatpush1.bf16.msra.mxu0 0
      %1261 = vmatprep.subr.bf16.mxu0 0
      %1262 = vmatpush1.bf16.msra.mxu0 0
      %1263 = vmatprep.subr.bf16.mxu0 0
      %1264 = vmatpush1.bf16.msra.mxu0 0
      %1265 = vmatprep.subr.bf16.mxu0 0
      %1266 = vmatpush1.bf16.msra.mxu0 0
      %1267 = vmatprep.mubr.bf16.mxu0 0
      %1268 = vmatmul.mubr.bf16.gmra.mrb[0].mxu0 %v1207
      %v1269 = vpop.f32.mrb[0].mxu0
      %v1270 = vadd.f32 0.0, %v1269
      %v1271 = vpop.f32.mrb[0].mxu0
      %v1272 = vadd.f32 0.0, %v1271
      %v1273 = vpop.f32.mrb[0].mxu0
      %v1274 = vadd.f32 0.0, %v1273
      %v1275 = vpop.f32.mrb[0].mxu0
      %v1276 = vadd.f32 0.0, %v1275
      %1277 = vdwg.mxu0
      %1278 = vmatprep.subr.bf16.mxu0 0
      %1279 = vmatpush1.bf16.msra.mxu0 %v431
      %1280 = vmatprep.subr.bf16.mxu0 0
      %1281 = vmatpush1.bf16.msra.mxu0 %v434
      %1282 = vmatprep.subr.bf16.mxu0 0
      %1283 = vmatpush1.bf16.msra.mxu0 %v437
      %1284 = vmatprep.subr.bf16.mxu0 0
      %1285 = vmatpush1.bf16.msra.mxu0 %v440
      %1286 = vmatprep.subr.bf16.mxu0 0
      %1287 = vmatpush1.bf16.msra.mxu0 %v443
      %1288 = vmatprep.subr.bf16.mxu0 0
      %1289 = vmatpush1.bf16.msra.mxu0 %v446
      %1290 = vmatprep.subr.bf16.mxu0 0
      %1291 = vmatpush1.bf16.msra.mxu0 %v449
      %1292 = vmatprep.subr.bf16.mxu0 0
      %1293 = vmatpush1.bf16.msra.mxu0 %v452
      %1294 = vmatprep.subr.bf16.mxu0 0
      %1295 = vmatpush1.bf16.msra.mxu0 0
      %1296 = vmatprep.subr.bf16.mxu0 0
      %1297 = vmatpush1.bf16.msra.mxu0 0
      %1298 = vmatprep.subr.bf16.mxu0 0
      %1299 = vmatpush1.bf16.msra.mxu0 0
      %1300 = vmatprep.subr.bf16.mxu0 0
      %1301 = vmatpush1.bf16.msra.mxu0 0
      %1302 = vmatprep.subr.bf16.mxu0 0
      %1303 = vmatpush1.bf16.msra.mxu0 0
      %1304 = vmatprep.subr.bf16.mxu0 0
      %1305 = vmatpush1.bf16.msra.mxu0 0
      %1306 = vmatprep.subr.bf16.mxu0 0
      %1307 = vmatpush1.bf16.msra.mxu0 0
      %1308 = vmatprep.subr.bf16.mxu0 0
      %1309 = vmatpush1.bf16.msra.mxu0 0
      %1310 = vmatprep.mubr.bf16.mxu0 0
      %1311 = vmatmul.mubr.bf16.gmra.mrb[0].mxu0 %v1207
      %v1312 = vpop.f32.mrb[0].mxu0
      %v1313 = vadd.f32 0.0, %v1312
      %v1314 = vpop.f32.mrb[0].mxu0
      %v1315 = vpop.f32.mrb[0].mxu0
      %v1316 = vadd.f32 0.0, %v1315
      %v1317 = vpop.f32.mrb[0].mxu0
      %1318 = vdwg.mxu0
      %v1319 = vadd.f32 %v1229, %v1270
      %v1320 = vadd.f32 %v1230, %v1272
      %v1321 = vadd.f32 %v1232, %v1274
      %v1322 = vadd.f32 %v1233, %v1276
      %v1323 = vxor.u32 %v1319, 2147483648
      %v1324 = vxor.u32 %v1320, 2147483648
      %v1325 = vxor.u32 %v1321, 2147483648
      %v1326 = vxor.u32 %v1322, 2147483648
      %v1327 = vmul.f32 %v1323, 1.442695
      %v1328 = vpow.pop %v1327
      %v1329 = vmul.f32 %v1324, 1.442695
      %v1330 = vpow.pop %v1329
      %v1331 = vmul.f32 %v1325, 1.442695
      %v1332 = vpow.pop %v1331
      %v1333 = vmul.f32 %v1326, 1.442695
      %v1334 = vpow.pop %v1333
      %v1335 = vadd.f32 %v1328, 1.0
      %v1336 = vadd.f32 %v1330, 1.0
      %v1337 = vadd.f32 %v1332, 1.0
      %v1338 = vadd.f32 %v1334, 1.0
      %v1339 = vrcp.pop %v1335
      %v1340 = vmul.f32 1.0, %v1339
      %v1341 = vrcp.pop %v1336
      %v1342 = vmul.f32 1.0, %v1341
      %v1343 = vrcp.pop %v1337
      %v1344 = vmul.f32 1.0, %v1343
      %v1345 = vrcp.pop %v1338
      %v1346 = vmul.f32 1.0, %v1345
      %v1347 = vmul.f32 %v1340, %v1313
      %v1348 = vmul.f32 %v1344, %v1316
      %v1349 = vadd.f32 %v1231, %v1347
      %v1350 = vadd.f32 %v1234, %v1348
      %v1351 = vtanh.pop %v1349
      %v1352 = vtanh.pop %v1350
      %v1353 = vsub.f32 %v1205, %v1351
      %v1354 = vsub.f32 %v1206, %v1352
      %v1355 = vmul.f32 %v1342, %v1353
      %v1356 = vmul.f32 %v1346, %v1354
      %v1357 = vadd.f32 %v1351, %v1355
      %v1358 = vadd.f32 %v1352, %v1356
      %v1359 = vpack.c.bf16 %v1358, %v1357
      %v1361 = vunpack.c.l.b16 %v1359
      %v1362 = vunpack.c.h.b16 %v1359
      %v1363 = vpack.c.b16 %v1361, %v1361
      %v1364 = vpack.c.b16 %v1362, %v1362
      %s1367 = smul.u32 %s1221, 2
      %s1368 = smul.addr %s1367, 4
      %s1369 = scalar_lea.vmem %s286, %s1368
      %1370 = vst [vmem:[%s1369] sm:$0xf] %v1363
      %1371 = vst [vmem:[%s1369 + $0x4] sm:$0xf] %v1364
      %s1372 = smul.u32 %s18, 4294967291
      %s1373 = sadd.s32 %s1372, 6
      %s1374 = smul.u32 %s1373, 6
      %s1375 = smul.addr %s1374, 4
      %s1376 = scalar_lea.vmem %s257, %s1375
      %v1377 = vld [vmem:[%s1376] sm:$0xff]
      %v1378 = vld [vmem:[%s1376 + $0x8] sm:$0xf]
      %v1379 = vld [vmem:[%s1376 + $0xc] sm:$0xff]
      %v1380 = vld [vmem:[%s1376 + $0x14] sm:$0xf]
      %v1381 = vunpack.c.l.bf16 %v1377
      %v1382 = vunpack.c.h.bf16 %v1377
      %v1383 = vunpack.c.l.bf16 %v1378
      %v1384 = vunpack.c.l.bf16 %v1379
      %v1385 = vunpack.c.h.bf16 %v1379
      %v1386 = vunpack.c.l.bf16 %v1380
      %1387 = vmatprep.subr.bf16.mxu0 %v430
      %1388 = vmatpush1.bf16.msra.mxu0 %v429
      %1389 = vmatprep.subr.bf16.mxu0 %v433
      %1390 = vmatpush1.bf16.msra.mxu0 %v432
      %1391 = vmatprep.subr.bf16.mxu0 %v436
      %1392 = vmatpush1.bf16.msra.mxu0 %v435
      %1393 = vmatprep.subr.bf16.mxu0 %v439
      %1394 = vmatpush1.bf16.msra.mxu0 %v438
      %1395 = vmatprep.subr.bf16.mxu0 %v442
      %1396 = vmatpush1.bf16.msra.mxu0 %v441
      %1397 = vmatprep.subr.bf16.mxu0 %v445
      %1398 = vmatpush1.bf16.msra.mxu0 %v444
      %1399 = vmatprep.subr.bf16.mxu0 %v448
      %1400 = vmatpush1.bf16.msra.mxu0 %v447
      %1401 = vmatprep.subr.bf16.mxu0 %v451
      %1402 = vmatpush1.bf16.msra.mxu0 %v450
      %1403 = vmatprep.subr.bf16.mxu0 0
      %1404 = vmatpush1.bf16.msra.mxu0 0
      %1405 = vmatprep.subr.bf16.mxu0 0
      %1406 = vmatpush1.bf16.msra.mxu0 0
      %1407 = vmatprep.subr.bf16.mxu0 0
      %1408 = vmatpush1.bf16.msra.mxu0 0
      %1409 = vmatprep.subr.bf16.mxu0 0
      %1410 = vmatpush1.bf16.msra.mxu0 0
      %1411 = vmatprep.subr.bf16.mxu0 0
      %1412 = vmatpush1.bf16.msra.mxu0 0
      %1413 = vmatprep.subr.bf16.mxu0 0
      %1414 = vmatpush1.bf16.msra.mxu0 0
      %1415 = vmatprep.subr.bf16.mxu0 0
      %1416 = vmatpush1.bf16.msra.mxu0 0
      %1417 = vmatprep.subr.bf16.mxu0 0
      %1418 = vmatpush1.bf16.msra.mxu0 0
      %1419 = vmatprep.mubr.bf16.mxu0 0
      %1420 = vmatmul.mubr.bf16.gmra.mrb[0].mxu0 %v1359
      %v1421 = vpop.f32.mrb[0].mxu0
      %v1422 = vadd.f32 0.0, %v1421
      %v1423 = vpop.f32.mrb[0].mxu0
      %v1424 = vadd.f32 0.0, %v1423
      %v1425 = vpop.f32.mrb[0].mxu0
      %v1426 = vadd.f32 0.0, %v1425
      %v1427 = vpop.f32.mrb[0].mxu0
      %v1428 = vadd.f32 0.0, %v1427
      %1429 = vdwg.mxu0
      %1430 = vmatprep.subr.bf16.mxu0 0
      %1431 = vmatpush1.bf16.msra.mxu0 %v431
      %1432 = vmatprep.subr.bf16.mxu0 0
      %1433 = vmatpush1.bf16.msra.mxu0 %v434
      %1434 = vmatprep.subr.bf16.mxu0 0
      %1435 = vmatpush1.bf16.msra.mxu0 %v437
      %1436 = vmatprep.subr.bf16.mxu0 0
      %1437 = vmatpush1.bf16.msra.mxu0 %v440
      %1438 = vmatprep.subr.bf16.mxu0 0
      %1439 = vmatpush1.bf16.msra.mxu0 %v443
      %1440 = vmatprep.subr.bf16.mxu0 0
      %1441 = vmatpush1.bf16.msra.mxu0 %v446
      %1442 = vmatprep.subr.bf16.mxu0 0
      %1443 = vmatpush1.bf16.msra.mxu0 %v449
      %1444 = vmatprep.subr.bf16.mxu0 0
      %1445 = vmatpush1.bf16.msra.mxu0 %v452
      %1446 = vmatprep.subr.bf16.mxu0 0
      %1447 = vmatpush1.bf16.msra.mxu0 0
      %1448 = vmatprep.subr.bf16.mxu0 0
      %1449 = vmatpush1.bf16.msra.mxu0 0
      %1450 = vmatprep.subr.bf16.mxu0 0
      %1451 = vmatpush1.bf16.msra.mxu0 0
      %1452 = vmatprep.subr.bf16.mxu0 0
      %1453 = vmatpush1.bf16.msra.mxu0 0
      %1454 = vmatprep.subr.bf16.mxu0 0
      %1455 = vmatpush1.bf16.msra.mxu0 0
      %1456 = vmatprep.subr.bf16.mxu0 0
      %1457 = vmatpush1.bf16.msra.mxu0 0
      %1458 = vmatprep.subr.bf16.mxu0 0
      %1459 = vmatpush1.bf16.msra.mxu0 0
      %1460 = vmatprep.subr.bf16.mxu0 0
      %1461 = vmatpush1.bf16.msra.mxu0 0
      %1462 = vmatprep.mubr.bf16.mxu0 0
      %1463 = vmatmul.mubr.bf16.gmra.mrb[0].mxu0 %v1359
      %v1464 = vpop.f32.mrb[0].mxu0
      %v1465 = vadd.f32 0.0, %v1464
      %v1466 = vpop.f32.mrb[0].mxu0
      %v1467 = vpop.f32.mrb[0].mxu0
      %v1468 = vadd.f32 0.0, %v1467
      %v1469 = vpop.f32.mrb[0].mxu0
      %1470 = vdwg.mxu0
      %v1471 = vadd.f32 %v1381, %v1422
      %v1472 = vadd.f32 %v1382, %v1424
      %v1473 = vadd.f32 %v1384, %v1426
      %v1474 = vadd.f32 %v1385, %v1428
      %v1475 = vxor.u32 %v1471, 2147483648
      %v1476 = vxor.u32 %v1472, 2147483648
      %v1477 = vxor.u32 %v1473, 2147483648
      %v1478 = vxor.u32 %v1474, 2147483648
      %v1479 = vmul.f32 %v1475, 1.442695
      %v1480 = vpow.pop %v1479
      %v1481 = vmul.f32 %v1476, 1.442695
      %v1482 = vpow.pop %v1481
      %v1483 = vmul.f32 %v1477, 1.442695
      %v1484 = vpow.pop %v1483
      %v1485 = vmul.f32 %v1478, 1.442695
      %v1486 = vpow.pop %v1485
      %v1487 = vadd.f32 %v1480, 1.0
      %v1488 = vadd.f32 %v1482, 1.0
      %v1489 = vadd.f32 %v1484, 1.0
      %v1490 = vadd.f32 %v1486, 1.0
      %v1491 = vrcp.pop %v1487
      %v1492 = vmul.f32 1.0, %v1491
      %v1493 = vrcp.pop %v1488
      %v1494 = vmul.f32 1.0, %v1493
      %v1495 = vrcp.pop %v1489
      %v1496 = vmul.f32 1.0, %v1495
      %v1497 = vrcp.pop %v1490
      %v1498 = vmul.f32 1.0, %v1497
      %v1499 = vmul.f32 %v1492, %v1465
      %v1500 = vmul.f32 %v1496, %v1468
      %v1501 = vadd.f32 %v1383, %v1499
      %v1502 = vadd.f32 %v1386, %v1500
      %v1503 = vtanh.pop %v1501
      %v1504 = vtanh.pop %v1502
      %v1505 = vsub.f32 %v1357, %v1503
      %v1506 = vsub.f32 %v1358, %v1504
      %v1507 = vmul.f32 %v1494, %v1505
      %v1508 = vmul.f32 %v1498, %v1506
      %v1509 = vadd.f32 %v1503, %v1507
      %v1510 = vadd.f32 %v1504, %v1508
      %v1511 = vpack.c.bf16 %v1510, %v1509
      %v1513 = vunpack.c.l.b16 %v1511
      %v1514 = vunpack.c.h.b16 %v1511
      %v1515 = vpack.c.b16 %v1513, %v1513
      %v1516 = vpack.c.b16 %v1514, %v1514
      %s1519 = smul.u32 %s1373, 2
      %s1520 = smul.addr %s1519, 4
      %s1521 = scalar_lea.vmem %s286, %s1520
      %1522 = vst [vmem:[%s1521] sm:$0xf] %v1515
      %1523 = vst [vmem:[%s1521 + $0x4] sm:$0xf] %v1516
      %s1524 = smul.u32 %s18, 4294967289
      %s1525 = sadd.s32 %s1524, 7
      %s1526 = smul.u32 %s1525, 6
      %s1527 = smul.addr %s1526, 4
      %s1528 = scalar_lea.vmem %s257, %s1527
      %v1529 = vld [vmem:[%s1528] sm:$0xff]
      %v1530 = vld [vmem:[%s1528 + $0x8] sm:$0xf]
      %v1531 = vld [vmem:[%s1528 + $0xc] sm:$0xff]
      %v1532 = vld [vmem:[%s1528 + $0x14] sm:$0xf]
      %v1533 = vunpack.c.l.bf16 %v1529
      %v1534 = vunpack.c.h.bf16 %v1529
      %v1535 = vunpack.c.l.bf16 %v1530
      %v1536 = vunpack.c.l.bf16 %v1531
      %v1537 = vunpack.c.h.bf16 %v1531
      %v1538 = vunpack.c.l.bf16 %v1532
      %1539 = vmatprep.subr.bf16.mxu0 %v430
      %1540 = vmatpush1.bf16.msra.mxu0 %v429
      %1541 = vmatprep.subr.bf16.mxu0 %v433
      %1542 = vmatpush1.bf16.msra.mxu0 %v432
      %1543 = vmatprep.subr.bf16.mxu0 %v436
      %1544 = vmatpush1.bf16.msra.mxu0 %v435
      %1545 = vmatprep.subr.bf16.mxu0 %v439
      %1546 = vmatpush1.bf16.msra.mxu0 %v438
      %1547 = vmatprep.subr.bf16.mxu0 %v442
      %1548 = vmatpush1.bf16.msra.mxu0 %v441
      %1549 = vmatprep.subr.bf16.mxu0 %v445
      %1550 = vmatpush1.bf16.msra.mxu0 %v444
      %1551 = vmatprep.subr.bf16.mxu0 %v448
      %1552 = vmatpush1.bf16.msra.mxu0 %v447
      %1553 = vmatprep.subr.bf16.mxu0 %v451
      %1554 = vmatpush1.bf16.msra.mxu0 %v450
      %1555 = vmatprep.subr.bf16.mxu0 0
      %1556 = vmatpush1.bf16.msra.mxu0 0
      %1557 = vmatprep.subr.bf16.mxu0 0
      %1558 = vmatpush1.bf16.msra.mxu0 0
      %1559 = vmatprep.subr.bf16.mxu0 0
      %1560 = vmatpush1.bf16.msra.mxu0 0
      %1561 = vmatprep.subr.bf16.mxu0 0
      %1562 = vmatpush1.bf16.msra.mxu0 0
      %1563 = vmatprep.subr.bf16.mxu0 0
      %1564 = vmatpush1.bf16.msra.mxu0 0
      %1565 = vmatprep.subr.bf16.mxu0 0
      %1566 = vmatpush1.bf16.msra.mxu0 0
      %1567 = vmatprep.subr.bf16.mxu0 0
      %1568 = vmatpush1.bf16.msra.mxu0 0
      %1569 = vmatprep.subr.bf16.mxu0 0
      %1570 = vmatpush1.bf16.msra.mxu0 0
      %1571 = vmatprep.mubr.bf16.mxu0 0
      %1572 = vmatmul.mubr.bf16.gmra.mrb[0].mxu0 %v1511
      %v1573 = vpop.f32.mrb[0].mxu0
      %v1574 = vadd.f32 0.0, %v1573
      %v1575 = vpop.f32.mrb[0].mxu0
      %v1576 = vadd.f32 0.0, %v1575
      %v1577 = vpop.f32.mrb[0].mxu0
      %v1578 = vadd.f32 0.0, %v1577
      %v1579 = vpop.f32.mrb[0].mxu0
      %v1580 = vadd.f32 0.0, %v1579
      %1581 = vdwg.mxu0
      %1582 = vmatprep.subr.bf16.mxu0 0
      %1583 = vmatpush1.bf16.msra.mxu0 %v431
      %1584 = vmatprep.subr.bf16.mxu0 0
      %1585 = vmatpush1.bf16.msra.mxu0 %v434
      %1586 = vmatprep.subr.bf16.mxu0 0
      %1587 = vmatpush1.bf16.msra.mxu0 %v437
      %1588 = vmatprep.subr.bf16.mxu0 0
      %1589 = vmatpush1.bf16.msra.mxu0 %v440
      %1590 = vmatprep.subr.bf16.mxu0 0
      %1591 = vmatpush1.bf16.msra.mxu0 %v443
      %1592 = vmatprep.subr.bf16.mxu0 0
      %1593 = vmatpush1.bf16.msra.mxu0 %v446
      %1594 = vmatprep.subr.bf16.mxu0 0
      %1595 = vmatpush1.bf16.msra.mxu0 %v449
      %1596 = vmatprep.subr.bf16.mxu0 0
      %1597 = vmatpush1.bf16.msra.mxu0 %v452
      %1598 = vmatprep.subr.bf16.mxu0 0
      %1599 = vmatpush1.bf16.msra.mxu0 0
      %1600 = vmatprep.subr.bf16.mxu0 0
      %1601 = vmatpush1.bf16.msra.mxu0 0
      %1602 = vmatprep.subr.bf16.mxu0 0
      %1603 = vmatpush1.bf16.msra.mxu0 0
      %1604 = vmatprep.subr.bf16.mxu0 0
      %1605 = vmatpush1.bf16.msra.mxu0 0
      %1606 = vmatprep.subr.bf16.mxu0 0
      %1607 = vmatpush1.bf16.msra.mxu0 0
      %1608 = vmatprep.subr.bf16.mxu0 0
      %1609 = vmatpush1.bf16.msra.mxu0 0
      %1610 = vmatprep.subr.bf16.mxu0 0
      %1611 = vmatpush1.bf16.msra.mxu0 0
      %1612 = vmatprep.subr.bf16.mxu0 0
      %1613 = vmatpush1.bf16.msra.mxu0 0
      %1614 = vmatprep.mubr.bf16.mxu0 0
      %1615 = vmatmul.mubr.bf16.gmra.mrb[0].mxu0 %v1511
      %v1616 = vpop.f32.mrb[0].mxu0
      %v1617 = vadd.f32 0.0, %v1616
      %v1618 = vpop.f32.mrb[0].mxu0
      %v1619 = vpop.f32.mrb[0].mxu0
      %v1620 = vadd.f32 0.0, %v1619
      %v1621 = vpop.f32.mrb[0].mxu0
      %1622 = vdwg.mxu0
      %v1623 = vadd.f32 %v1533, %v1574
      %v1624 = vadd.f32 %v1534, %v1576
      %v1625 = vadd.f32 %v1536, %v1578
      %v1626 = vadd.f32 %v1537, %v1580
      %v1627 = vxor.u32 %v1623, 2147483648
      %v1628 = vxor.u32 %v1624, 2147483648
      %v1629 = vxor.u32 %v1625, 2147483648
      %v1630 = vxor.u32 %v1626, 2147483648
      %v1631 = vmul.f32 %v1627, 1.442695
      %v1632 = vpow.pop %v1631
      %v1633 = vmul.f32 %v1628, 1.442695
      %v1634 = vpow.pop %v1633
      %v1635 = vmul.f32 %v1629, 1.442695
      %v1636 = vpow.pop %v1635
      %v1637 = vmul.f32 %v1630, 1.442695
      %v1638 = vpow.pop %v1637
      %v1639 = vadd.f32 %v1632, 1.0
      %v1640 = vadd.f32 %v1634, 1.0
      %v1641 = vadd.f32 %v1636, 1.0
      %v1642 = vadd.f32 %v1638, 1.0
      %v1643 = vrcp.pop %v1639
      %v1644 = vmul.f32 1.0, %v1643
      %v1645 = vrcp.pop %v1640
      %v1646 = vmul.f32 1.0, %v1645
      %v1647 = vrcp.pop %v1641
      %v1648 = vmul.f32 1.0, %v1647
      %v1649 = vrcp.pop %v1642
      %v1650 = vmul.f32 1.0, %v1649
      %v1651 = vmul.f32 %v1644, %v1617
      %v1652 = vmul.f32 %v1648, %v1620
      %v1653 = vadd.f32 %v1535, %v1651
      %v1654 = vadd.f32 %v1538, %v1652
      %v1655 = vtanh.pop %v1653
      %v1656 = vtanh.pop %v1654
      %v1657 = vsub.f32 %v1509, %v1655
      %v1658 = vsub.f32 %v1510, %v1656
      %v1659 = vmul.f32 %v1646, %v1657
      %v1660 = vmul.f32 %v1650, %v1658
      %v1661 = vadd.f32 %v1655, %v1659
      %v1662 = vadd.f32 %v1656, %v1660
      %v1663 = vpack.c.bf16 %v1662, %v1661
      %v1665 = vunpack.c.l.b16 %v1663
      %v1666 = vunpack.c.h.b16 %v1663
      %v1667 = vpack.c.b16 %v1665, %v1665
      %v1668 = vpack.c.b16 %v1666, %v1666
      %s1671 = smul.u32 %s1525, 2
      %s1672 = smul.addr %s1671, 4
      %s1673 = scalar_lea.vmem %s286, %s1672
      %1674 = vst [vmem:[%s1673] sm:$0xf] %v1667
      %1675 = vst [vmem:[%s1673 + $0x4] sm:$0xf] %v1668
      %1676 = vst [vmem:[#allocation2] sm:$0xff] %v1661
      %1677 = vst [vmem:[#allocation2 + $0x8] sm:$0xff] %v1662
      %s1678 = smul.u32 %s20, 2
      %s1679 = ssub.s32 0, %s1678
      %s1680 = smul.u32 %s18, %s1679
      %s1681 = sadd.s32 %s20, %s1680
      %s1682 = smul.u32 8, %s1681
      %s1683 = smul.u32 2, %s19
      %p1684 = scmp.lt.s32.totalorder %s18, 1
      %s1685 = scalar_select %p1684, %s18, 1
      %p1686 = scmp.lt.s32.totalorder %s1682, 7
      %s1687 = scalar_select %p1686, %s1682, 7
      %p1688 = scmp.lt.s32.totalorder %s1683, 1
      %s1689 = scalar_select %p1688, %s1683, 1
      %s1690 = smul.addr %s1687, 2
      %s1691 = sadd.s32 %s1689, %s1690
      %s1692 = smul.addr %s1685, 16
      %s1693 = sadd.s32 %s1691, %s1692
      %s1694 = smul.addr %s1693, 4
      %s1695 = scalar_lea.vmem %s2, %s1694
      // Predicated region
      $region33: #{seq_to_seq_forward.2} parent=27 // pred_check
        %p1696 = pneg %p126
      $region34: #{seq_to_seq_forward.2} parent=27 // pred_check_branch
        %1698 = sbr.rel (%p1696) target = $region36
      $region35: #{seq_to_seq_forward.2} parent=27 // pred_region
        %s1699 = smul.u32 %s20, 2
        %s1700 = ssub.s32 0, %s1699
        %s1701 = smul.u32 %s18, %s1700
        %s1702 = sadd.s32 %s20, %s1701
        %s1703 = smul.u32 8, %s1702
        %s1704 = smul.u32 2, %s19
      $region36: #{seq_to_seq_forward.2} parent=27 // pred_fallthru
        _
    $region28: #{seq_to_seq_forward.2} parent=5 // pred_fallthru
      _
    %p1705 = scmp.le.s32.totalorder 2, %s8
    // Predicated region
    $region37: #{seq_to_seq_forward.2} parent=5 // pred_check
      %p1706 = pneg %p1705
    $region38: #{seq_to_seq_forward.2} parent=5 // pred_check_branch
      %1708 = sbr.rel (%p1706) target = $region40
    $region39: #{seq_to_seq_forward.2} parent=5 // pred_region
      %s1709 = ssub.s32 %s8, 2
      // Predicated region
      $region41: #{seq_to_seq_forward.2} parent=39 // pred_check
        %p1710 = pneg %p132
      $region42: #{seq_to_seq_forward.2} parent=39 // pred_check_branch
        %1712 = sbr.rel (%p1710) target = $region44
      $region43: #{seq_to_seq_forward.2} parent=39 // pred_region
        %s1713 = smul.u32 %s23, 2
        %s1714 = ssub.s32 0, %s1713
        %s1715 = smul.u32 %s21, %s1714
        %s1716 = sadd.s32 %s23, %s1715
        %s1717 = smul.u32 8, %s1716
        %s1718 = smul.u32 2, %s22
        %p1719 = scmp.lt.s32.totalorder %s21, 1
        %s1720 = scalar_select %p1719, %s21, 1
        %p1721 = scmp.lt.s32.totalorder %s1717, 7
        %s1722 = scalar_select %p1721, %s1717, 7
        %p1723 = scmp.lt.s32.totalorder %s1718, 1
        %s1724 = scalar_select %p1723, %s1718, 1
        %s1725 = smul.addr %s1722, 2
        %s1726 = sadd.s32 %s1724, %s1725
        %s1727 = smul.addr %s1720, 16
        %s1728 = sadd.s32 %s1726, %s1727
        %s1729 = smul.addr %s1728, 4
        %s1730 = scalar_lea.vmem %s2, %s1729
      $region44: #{seq_to_seq_forward.2} parent=39 // pred_fallthru
        _
    $region40: #{seq_to_seq_forward.2} parent=5 // pred_fallthru
      _
  $region6: #{seq_to_seq_forward.2} parent=0 // loop_footer
    %s12 = sadd.s32 1, %s8
  $region7: #{seq_to_seq_forward.2} parent=0 // loop_footer_branch
    %7 = sbr.rel target = $region3
  $region8: #{seq_to_seq_forward.2} parent=0 // loop_exit
    _

</llo_original>
